<compile_context>
chip_gen: v7x
topology: tpu7x:2x2x1
jax: 0.10.0
libtpu: 0.0.40
codegen_flags: <defaults>
</compile_context>

<pallas_src>
import functools
import math

import jax
import jax.numpy as jnp
import numpy as np
from jax.experimental import pallas as pl
from jax.experimental.pallas import tpu as pltpu

_LN_EPS = 1e-5          # torch.nn.LayerNorm default eps
_INV_SQRT2 = 1.0 / math.sqrt(2.0)


# ----------------------------- in-kernel helpers -----------------------------

def _erf_approx(z):
    # Abramowitz & Stegun 7.1.26, |abs err| < 1.5e-7 (exact-GELU, nn.GELU default).
    a1, a2, a3, a4, a5 = 0.254829592, -0.284496736, 1.421413741, -1.453152027, 1.061405429
    p = 0.3275911
    az = jnp.abs(z)
    t = 1.0 / (1.0 + p * az)
    poly = ((((a5 * t + a4) * t + a3) * t + a2) * t + a1) * t
    e = 1.0 - poly * jnp.exp(-az * az)
    return jnp.where(z < 0, -e, e)


def _gelu_exact(z):
    return 0.5 * z * (1.0 + _erf_approx(z * _INV_SQRT2))


def _layer_norm(z, gamma, beta):
    mu = jnp.mean(z, axis=-1, keepdims=True)
    zc = z - mu
    var = jnp.mean(zc * zc, axis=-1, keepdims=True)
    return zc * jax.lax.rsqrt(var + _LN_EPS) * gamma + beta


# --------------------------------- the kernel --------------------------------

def _block_kernel(x_ref, g1_ref, b1_ref, g2_ref, b2_ref,
                  tf_ref, wr_ref, wi_ref, ti_ref,
                  w1_ref, bm1_ref, w2_ref, bm2_ref,
                  o_ref):
    rows, c = x_ref.shape            # rows = bt * N
    n = ti_ref.shape[0]              # tokens per image
    bt = rows // n                   # images in this block (static)

    x = x_ref[...]                   # (bt*N, C) f32

    # --- norm1 (f32) ---
    xn = _layer_norm(x, g1_ref[...], b1_ref[...])

    # --- GlobalFilter: rfft2 -> * complex weight -> irfft2 ('ortho') as real matmuls ---
    tf = tf_ref[...]                 # (2*ad, N)  bf16, stacked [Re; Im] forward operator
    ti = ti_ref[...]                 # (N, 2*ad)  bf16, stacked [Re | Im] inverse operator
    wr = wr_ref[...]                 # (ad, C)    f32
    wi = wi_ref[...]                 # (ad, C)    f32
    ad = wr.shape[0]

    xn_b = xn.astype(jnp.bfloat16)
    ys = []
    for img in range(bt):            # bt is small & static -> unrolled at trace time
        xb = xn_b[img * n:(img + 1) * n, :]                              # (N, C) bf16
        u = jnp.dot(tf, xb, preferred_element_type=jnp.float32)          # (2*ad, C) = [Re; Im]
        ur = u[:ad]
        ui = u[ad:]
        pr = ur * wr - ui * wi       # complex multiply by the learned filter, f32
        pi = ur * wi + ui * wr
        p = jnp.concatenate([pr, pi], axis=0).astype(jnp.bfloat16)       # (2*ad, C)
        ys.append(jnp.dot(ti, p, preferred_element_type=jnp.float32))    # (N, C) = irfft2
    y = ys[0] if bt == 1 else jnp.concatenate(ys, axis=0)                # (bt*N, C)

    # --- norm2 (f32) ---
    yn = _layer_norm(y, g2_ref[...], b2_ref[...])

    # --- MLP: fc1 -> exact GELU -> fc2 (dropout p=0, drop_path=0 => identity) ---
    h = jnp.dot(yn.astype(jnp.bfloat16), w1_ref[...],
                preferred_element_type=jnp.float32) + bm1_ref[...]
    h = _gelu_exact(h)
    m = jnp.dot(h.astype(jnp.bfloat16), w2_ref[...],
                preferred_element_type=jnp.float32) + bm2_ref[...]

    # --- residual (f32) ---
    o_ref[...] = x + m


# ------------------------------ host-side setup -------------------------------

@functools.lru_cache(maxsize=None)
def _fft_operators(a, b):
    """Stacked real matrices implementing ortho rfft2 / irfft2 on the flattened spatial axis.

    Forward: TF (2*a*d, N) so TF @ x = [Re(rfft2 x); Im(rfft2 x)]  (x real, flattened).
    Inverse: TI (N, 2*a*d) so TI @ [Re(P); Im(P)] = irfft2(P).
    Built once on the host with numpy (double precision), cast to bf16 for the MXU.
    """
    n = a * b
    d = b // 2 + 1
    basis = np.eye(n, dtype=np.float64).reshape(n, a, b)
    fwd = np.fft.rfft2(basis, axes=(1, 2), norm="ortho")                 # (n, a, d) complex
    tf = np.concatenate([np.real(fwd).reshape(n, a * d).T,
                         np.imag(fwd).reshape(n, a * d).T], axis=0)      # (2*ad, n)

    fbasis = np.eye(a * d, dtype=np.complex128).reshape(a * d, a, d)
    inv_r = np.fft.irfft2(fbasis, s=(a, b), axes=(1, 2), norm="ortho")   # (ad, a, b)
    inv_i = np.fft.irfft2(1j * fbasis, s=(a, b), axes=(1, 2), norm="ortho")
    ti = np.concatenate([inv_r.reshape(a * d, n).T,
                         inv_i.reshape(a * d, n).T], axis=1)             # (n, 2*ad)
    return (jnp.asarray(tf, dtype=jnp.bfloat16),
            jnp.asarray(ti, dtype=jnp.bfloat16))


def _pick_block_batch(B, N):
    """Images per grid step: enough rows to fill the MXU M-dim, >=2 steps if batch allows."""
    need = max(1, math.ceil(128 / N))
    bt = need if B >= 2 * need else min(B, need)
    while B % bt:
        bt -= 1
    return max(bt, 1)


def block_forward(x, params, *, block_batch=None):
    B, N, C = x.shape
    a = int(round(math.sqrt(N)))
    d = a // 2 + 1
    ad = a * d
    H = params["bm1"].shape[1]

    tf, ti = _fft_operators(a, a)                  # cached host-built operators (bf16)

    bt = block_batch if block_batch is not None else _pick_block_batch(B, N)
    assert B % bt == 0
    grid = (B // bt,)

    x2d = x.reshape(B * N, C)                      # free XLA reshape; kernel stays reshape-free

    def param_spec(shape):
        zeros = (0,) * len(shape)
        return pl.BlockSpec(shape, lambda i: zeros)

    grid_spec = pltpu.PrefetchScalarGridSpec(
        num_scalar_prefetch=0,
        grid=grid,
        in_specs=[
            pl.BlockSpec((bt * N, C), lambda i: (i, 0)),    # x block (bt images)
            param_spec((1, C)), param_spec((1, C)),         # norm1 gamma/beta
            param_spec((1, C)), param_spec((1, C)),         # norm2 gamma/beta
            param_spec((2 * ad, N)),                        # stacked forward DFT (bf16)
            param_spec((ad, C)), param_spec((ad, C)),       # complex weight Re/Im (f32)
            param_spec((N, 2 * ad)),                        # stacked inverse DFT (bf16)
            param_spec((C, H)), param_spec((1, H)),         # fc1 (bf16 weight, f32 bias)
            param_spec((H, C)), param_spec((1, C)),         # fc2 (bf16 weight, f32 bias)
        ],
        out_specs=pl.BlockSpec((bt * N, C), lambda i: (i, 0)),
    )

    const_inputs = (params["g1"], params["b1"], params["g2"], params["b2"],
                    tf, params["wr"], params["wi"], ti,
                    params["w1_bf16"], params["bm1"], params["w2_bf16"], params["bm2"])

    # Explicit VMEM budget: double-buffered params + x/out blocks + intermediate headroom.
    const_bytes = sum(int(np.prod(p.shape)) * p.dtype.itemsize for p in const_inputs)
    io_bytes = bt * N * C * 4
    need_bytes = 2 * const_bytes + 4 * io_bytes + 8 * bt * N * max(C, H) * 4
    vmem_limit = int(min(96 * 2 ** 20, max(32 * 2 ** 20, 2 * need_bytes)))

    fn = pl.pallas_call(
        _block_kernel,
        out_shape=jax.ShapeDtypeStruct((B * N, C), jnp.float32),
        grid_spec=grid_spec,
        compiler_params=pltpu.CompilerParams(
            dimension_semantics=("parallel",),
            vmem_limit_bytes=vmem_limit,
        ),
    )
    out2d = fn(x2d, *const_inputs)
    return out2d.reshape(B, N, C)


def init_params(key, dim, n_tokens, mlp_ratio=4.0):
    a = int(round(math.sqrt(n_tokens)))
    d = a // 2 + 1
    hidden = int(dim * mlp_ratio)
    ks = jax.random.split(key, 5)

    # LayerNorm (torch defaults): weight=1, bias=0
    g1 = jnp.ones((1, dim), jnp.float32)
    b1 = jnp.zeros((1, dim), jnp.float32)
    g2 = jnp.ones((1, dim), jnp.float32)
    b2 = jnp.zeros((1, dim), jnp.float32)

    # GlobalFilter.complex_weight: randn(size, size, dim, 2) * 0.02, sliced [:, :D] in forward.
    cw_full = 0.02 * jax.random.normal(ks[0], (a, a, dim, 2), jnp.float32)
    cw = cw_full[:, :d]                            # (a, d, dim, 2)
    wr = cw[..., 0].reshape(a * d, dim)
    wi = cw[..., 1].reshape(a * d, dim)

    # Mlp: fc1 (dim->hidden), fc2 (hidden->dim), torch Linear default init bounds.
    lim1 = 1.0 / math.sqrt(dim)
    w1 = jax.random.uniform(ks[1], (dim, hidden), jnp.float32, -lim1, lim1)
    bm1 = jax.random.uniform(ks[2], (1, hidden), jnp.float32, -lim1, lim1)
    lim2 = 1.0 / math.sqrt(hidden)
    w2 = jax.random.uniform(ks[3], (hidden, dim), jnp.float32, -lim2, lim2)
    bm2 = jax.random.uniform(ks[4], (1, dim), jnp.float32, -lim2, lim2)

    return dict(g1=g1, b1=b1, g2=g2, b2=b2, wr=wr, wi=wi,
                w1=w1, bm1=bm1, w2=w2, bm2=bm2, cw=cw,
                w1_bf16=w1.astype(jnp.bfloat16), w2_bf16=w2.astype(jnp.bfloat16))


# ------------------------------ pure-JAX reference ----------------------------

def block_reference(x, params):
    B, N, C = x.shape
    a = int(round(math.sqrt(N)))

    def ln(z, g, b):
        mu = z.mean(-1, keepdims=True)
        v = ((z - mu) ** 2).mean(-1, keepdims=True)
        return (z - mu) / jnp.sqrt(v + _LN_EPS) * g + b

    x1 = ln(x, params["g1"], params["b1"])
    xs = x1.reshape(B, a, a, C).astype(jnp.float32)
    fx = jnp.fft.rfft2(xs, axes=(1, 2), norm="ortho")
    w = params["cw"][..., 0] + 1j * params["cw"][..., 1]        # (a, d, C)
    fx = fx * w[None]
    y = jnp.fft.irfft2(fx, s=(a, a), axes=(1, 2), norm="ortho").reshape(B, N, C)
    y2 = ln(y, params["g2"], params["b2"])
    h = jax.nn.gelu(y2 @ params["w1"] + params["bm1"], approximate=False)
    m = h @ params["w2"] + params["bm2"]
    return x + m


# ------------------------------------ main ------------------------------------

if __name__ == "__main__":
    key = jax.random.PRNGKey(0)
    kx, kp = jax.random.split(key)

    B, dim, a = 2, 32, 8          # tokens N = a*a = 64, mlp hidden = 128
    N = a * a
    x = jax.random.normal(kx, (B, N, dim), jnp.float32)
    params = init_params(kp, dim, N)

    out = jax.block_until_ready(block_forward(x, params))

    # Sanity check vs. pure-JAX reference (loose enough for bf16 MXU operands, catches NaNs
    # and gross errors; observed max abs error is ~1e-2).
    ref = block_reference(x, params)
    assert out.shape == ref.shape
    assert bool(jnp.all(jnp.isfinite(out)))
    assert bool(jnp.max(jnp.abs(out - ref)) < 0.1)

    print("KERNEL_OK")
</pallas_src>

<mosaic_0001>
module attributes {stable_mosaic.version = 11 : i64} {
  func.func @_block_kernel(%arg0: i32, %arg1: memref<128x32xf32, #tpu.memory_space<vmem>>, %arg2: memref<1x32xf32, #tpu.memory_space<vmem>>, %arg3: memref<1x32xf32, #tpu.memory_space<vmem>>, %arg4: memref<1x32xf32, #tpu.memory_space<vmem>>, %arg5: memref<1x32xf32, #tpu.memory_space<vmem>>, %arg6: memref<80x64xbf16, #tpu.memory_space<vmem>>, %arg7: memref<40x32xf32, #tpu.memory_space<vmem>>, %arg8: memref<40x32xf32, #tpu.memory_space<vmem>>, %arg9: memref<64x80xbf16, #tpu.memory_space<vmem>>, %arg10: memref<32x128xbf16, #tpu.memory_space<vmem>>, %arg11: memref<1x128xf32, #tpu.memory_space<vmem>>, %arg12: memref<128x32xbf16, #tpu.memory_space<vmem>>, %arg13: memref<1x32xf32, #tpu.memory_space<vmem>>, %arg14: memref<128x32xf32, #tpu.memory_space<vmem>>) attributes {dimension_semantics = [#tpu.dimension_semantics<parallel>], iteration_bounds = array<i64: 1>, scalar_prefetch = 0 : i64, scratch_operands = 0 : i64, tpu.core_type = #tpu.core_type<tc>, window_params = [{transform_indices = @transform_0, window_bounds = array<i64: 128, 32>}, {pipeline_mode = #tpu.pipeline_mode<synchronous>, transform_indices = @transform_1, window_bounds = array<i64: 1, 32>}, {pipeline_mode = #tpu.pipeline_mode<synchronous>, transform_indices = @transform_2, window_bounds = array<i64: 1, 32>}, {pipeline_mode = #tpu.pipeline_mode<synchronous>, transform_indices = @transform_3, window_bounds = array<i64: 1, 32>}, {pipeline_mode = #tpu.pipeline_mode<synchronous>, transform_indices = @transform_4, window_bounds = array<i64: 1, 32>}, {pipeline_mode = #tpu.pipeline_mode<synchronous>, transform_indices = @transform_5, window_bounds = array<i64: 80, 64>}, {pipeline_mode = #tpu.pipeline_mode<synchronous>, transform_indices = @transform_6, window_bounds = array<i64: 40, 32>}, {pipeline_mode = #tpu.pipeline_mode<synchronous>, transform_indices = @transform_7, window_bounds = array<i64: 40, 32>}, {pipeline_mode = #tpu.pipeline_mode<synchronous>, transform_indices = @transform_8, window_bounds = array<i64: 64, 80>}, {pipeline_mode = #tpu.pipeline_mode<synchronous>, transform_indices = @transform_9, window_bounds = array<i64: 32, 128>}, {pipeline_mode = #tpu.pipeline_mode<synchronous>, transform_indices = @transform_10, window_bounds = array<i64: 1, 128>}, {pipeline_mode = #tpu.pipeline_mode<synchronous>, transform_indices = @transform_11, window_bounds = array<i64: 128, 32>}, {pipeline_mode = #tpu.pipeline_mode<synchronous>, transform_indices = @transform_12, window_bounds = array<i64: 1, 32>}, {transform_indices = @transform_13, window_bounds = array<i64: 128, 32>}]} {
    %c0 = arith.constant 0 : index
    %c0_0 = arith.constant 0 : index
    %0 = vector.load %arg1[%c0, %c0_0] : memref<128x32xf32, #tpu.memory_space<vmem>>, vector<128x32xf32>
    %c0_1 = arith.constant 0 : index
    %c0_2 = arith.constant 0 : index
    %1 = vector.load %arg2[%c0_1, %c0_2] : memref<1x32xf32, #tpu.memory_space<vmem>>, vector<1x32xf32>
    %c0_3 = arith.constant 0 : index
    %c0_4 = arith.constant 0 : index
    %2 = vector.load %arg3[%c0_3, %c0_4] : memref<1x32xf32, #tpu.memory_space<vmem>>, vector<1x32xf32>
    %cst = arith.constant dense<0.000000e+00> : vector<128xf32>
    %3 = vector.multi_reduction <add>, %0, %cst [1] : vector<128x32xf32> to vector<128xf32>
    %4 = vector.shape_cast %3 : vector<128xf32> to vector<128x1xf32>
    %cst_5 = arith.constant 3.200000e+01 : f32
    %5 = vector.broadcast %cst_5 : f32 to vector<128x1xf32>
    %6 = arith.divf %4, %5 : vector<128x1xf32>
    %7 = vector.broadcast %6 : vector<128x1xf32> to vector<128x32xf32>
    %8 = arith.subf %0, %7 : vector<128x32xf32>
    %9 = arith.mulf %8, %8 : vector<128x32xf32>
    %cst_6 = arith.constant dense<0.000000e+00> : vector<128xf32>
    %10 = vector.multi_reduction <add>, %9, %cst_6 [1] : vector<128x32xf32> to vector<128xf32>
    %11 = vector.shape_cast %10 : vector<128xf32> to vector<128x1xf32>
    %cst_7 = arith.constant 3.200000e+01 : f32
    %12 = vector.broadcast %cst_7 : f32 to vector<128x1xf32>
    %13 = arith.divf %11, %12 : vector<128x1xf32>
    %cst_8 = arith.constant 9.99999974E-6 : f32
    %14 = vector.broadcast %cst_8 : f32 to vector<128x1xf32>
    %15 = arith.addf %13, %14 : vector<128x1xf32>
    %16 = math.rsqrt %15 : vector<128x1xf32>
    %17 = vector.broadcast %16 : vector<128x1xf32> to vector<128x32xf32>
    %18 = arith.mulf %8, %17 : vector<128x32xf32>
    %19 = vector.broadcast %1 : vector<1x32xf32> to vector<128x32xf32>
    %20 = arith.mulf %18, %19 : vector<128x32xf32>
    %21 = vector.broadcast %2 : vector<1x32xf32> to vector<128x32xf32>
    %22 = arith.addf %20, %21 : vector<128x32xf32>
    %c0_9 = arith.constant 0 : index
    %c0_10 = arith.constant 0 : index
    %23 = vector.load %arg6[%c0_9, %c0_10] : memref<80x64xbf16, #tpu.memory_space<vmem>>, vector<80x64xbf16>
    %c0_11 = arith.constant 0 : index
    %c0_12 = arith.constant 0 : index
    %24 = vector.load %arg9[%c0_11, %c0_12] : memref<64x80xbf16, #tpu.memory_space<vmem>>, vector<64x80xbf16>
    %c0_13 = arith.constant 0 : index
    %c0_14 = arith.constant 0 : index
    %25 = vector.load %arg7[%c0_13, %c0_14] : memref<40x32xf32, #tpu.memory_space<vmem>>, vector<40x32xf32>
    %c0_15 = arith.constant 0 : index
    %c0_16 = arith.constant 0 : index
    %26 = vector.load %arg8[%c0_15, %c0_16] : memref<40x32xf32, #tpu.memory_space<vmem>>, vector<40x32xf32>
    %27 = arith.truncf %22 : vector<128x32xf32> to vector<128x32xbf16>
    %28 = vector.extract_strided_slice %27 {offsets = [0, 0], sizes = [64, 32], strides = [1, 1]} : vector<128x32xbf16> to vector<64x32xbf16>
    %cst_17 = arith.constant dense<0.000000e+00> : vector<80x32xf32>
    %29 = tpu.matmul %23, %28, %cst_17 {dimension_numbers = #tpu.dot_dimension_numbers<[1], [0], [0], [1], [0, 0, 1, 1], [], []>} : vector<80x64xbf16>, vector<64x32xbf16>, vector<80x32xf32> -> vector<80x32xf32>
    %30 = vector.extract_strided_slice %29 {offsets = [0, 0], sizes = [40, 32], strides = [1, 1]} : vector<80x32xf32> to vector<40x32xf32>
    %31 = vector.extract_strided_slice %29 {offsets = [40, 0], sizes = [40, 32], strides = [1, 1]} : vector<80x32xf32> to vector<40x32xf32>
    %32 = arith.mulf %30, %25 : vector<40x32xf32>
    %33 = arith.mulf %31, %26 : vector<40x32xf32>
    %34 = arith.subf %32, %33 : vector<40x32xf32>
    %35 = arith.mulf %30, %26 : vector<40x32xf32>
    %36 = arith.mulf %31, %25 : vector<40x32xf32>
    %37 = arith.addf %35, %36 : vector<40x32xf32>
    %38 = tpu.concatenate %34, %37 in 0 : vector<40x32xf32>, vector<40x32xf32> -> vector<80x32xf32>
    %39 = arith.truncf %38 : vector<80x32xf32> to vector<80x32xbf16>
    %cst_18 = arith.constant dense<0.000000e+00> : vector<64x32xf32>
    %40 = tpu.matmul %24, %39, %cst_18 {dimension_numbers = #tpu.dot_dimension_numbers<[1], [0], [0], [1], [0, 0, 1, 1], [], []>} : vector<64x80xbf16>, vector<80x32xbf16>, vector<64x32xf32> -> vector<64x32xf32>
    %41 = vector.extract_strided_slice %27 {offsets = [64, 0], sizes = [64, 32], strides = [1, 1]} : vector<128x32xbf16> to vector<64x32xbf16>
    %cst_19 = arith.constant dense<0.000000e+00> : vector<80x32xf32>
    %42 = tpu.matmul %23, %41, %cst_19 {dimension_numbers = #tpu.dot_dimension_numbers<[1], [0], [0], [1], [0, 0, 1, 1], [], []>} : vector<80x64xbf16>, vector<64x32xbf16>, vector<80x32xf32> -> vector<80x32xf32>
    %43 = vector.extract_strided_slice %42 {offsets = [0, 0], sizes = [40, 32], strides = [1, 1]} : vector<80x32xf32> to vector<40x32xf32>
    %44 = vector.extract_strided_slice %42 {offsets = [40, 0], sizes = [40, 32], strides = [1, 1]} : vector<80x32xf32> to vector<40x32xf32>
    %45 = arith.mulf %43, %25 : vector<40x32xf32>
    %46 = arith.mulf %44, %26 : vector<40x32xf32>
    %47 = arith.subf %45, %46 : vector<40x32xf32>
    %48 = arith.mulf %43, %26 : vector<40x32xf32>
    %49 = arith.mulf %44, %25 : vector<40x32xf32>
    %50 = arith.addf %48, %49 : vector<40x32xf32>
    %51 = tpu.concatenate %47, %50 in 0 : vector<40x32xf32>, vector<40x32xf32> -> vector<80x32xf32>
    %52 = arith.truncf %51 : vector<80x32xf32> to vector<80x32xbf16>
    %cst_20 = arith.constant dense<0.000000e+00> : vector<64x32xf32>
    %53 = tpu.matmul %24, %52, %cst_20 {dimension_numbers = #tpu.dot_dimension_numbers<[1], [0], [0], [1], [0, 0, 1, 1], [], []>} : vector<64x80xbf16>, vector<80x32xbf16>, vector<64x32xf32> -> vector<64x32xf32>
    %54 = tpu.concatenate %40, %53 in 0 : vector<64x32xf32>, vector<64x32xf32> -> vector<128x32xf32>
    %c0_21 = arith.constant 0 : index
    %c0_22 = arith.constant 0 : index
    %55 = vector.load %arg4[%c0_21, %c0_22] : memref<1x32xf32, #tpu.memory_space<vmem>>, vector<1x32xf32>
    %c0_23 = arith.constant 0 : index
    %c0_24 = arith.constant 0 : index
    %56 = vector.load %arg5[%c0_23, %c0_24] : memref<1x32xf32, #tpu.memory_space<vmem>>, vector<1x32xf32>
    %cst_25 = arith.constant dense<0.000000e+00> : vector<128xf32>
    %57 = vector.multi_reduction <add>, %54, %cst_25 [1] : vector<128x32xf32> to vector<128xf32>
    %58 = vector.shape_cast %57 : vector<128xf32> to vector<128x1xf32>
    %cst_26 = arith.constant 3.200000e+01 : f32
    %59 = vector.broadcast %cst_26 : f32 to vector<128x1xf32>
    %60 = arith.divf %58, %59 : vector<128x1xf32>
    %61 = vector.broadcast %60 : vector<128x1xf32> to vector<128x32xf32>
    %62 = arith.subf %54, %61 : vector<128x32xf32>
    %63 = arith.mulf %62, %62 : vector<128x32xf32>
    %cst_27 = arith.constant dense<0.000000e+00> : vector<128xf32>
    %64 = vector.multi_reduction <add>, %63, %cst_27 [1] : vector<128x32xf32> to vector<128xf32>
    %65 = vector.shape_cast %64 : vector<128xf32> to vector<128x1xf32>
    %cst_28 = arith.constant 3.200000e+01 : f32
    %66 = vector.broadcast %cst_28 : f32 to vector<128x1xf32>
    %67 = arith.divf %65, %66 : vector<128x1xf32>
    %cst_29 = arith.constant 9.99999974E-6 : f32
    %68 = vector.broadcast %cst_29 : f32 to vector<128x1xf32>
    %69 = arith.addf %67, %68 : vector<128x1xf32>
    %70 = math.rsqrt %69 : vector<128x1xf32>
    %71 = vector.broadcast %70 : vector<128x1xf32> to vector<128x32xf32>
    %72 = arith.mulf %62, %71 : vector<128x32xf32>
    %73 = vector.broadcast %55 : vector<1x32xf32> to vector<128x32xf32>
    %74 = arith.mulf %72, %73 : vector<128x32xf32>
    %75 = vector.broadcast %56 : vector<1x32xf32> to vector<128x32xf32>
    %76 = arith.addf %74, %75 : vector<128x32xf32>
    %77 = arith.truncf %76 : vector<128x32xf32> to vector<128x32xbf16>
    %c0_30 = arith.constant 0 : index
    %c0_31 = arith.constant 0 : index
    %78 = vector.load %arg10[%c0_30, %c0_31] : memref<32x128xbf16, #tpu.memory_space<vmem>>, vector<32x128xbf16>
    %cst_32 = arith.constant dense<0.000000e+00> : vector<128x128xf32>
    %79 = tpu.matmul %77, %78, %cst_32 {dimension_numbers = #tpu.dot_dimension_numbers<[1], [0], [0], [1], [0, 0, 1, 1], [], []>} : vector<128x32xbf16>, vector<32x128xbf16>, vector<128x128xf32> -> vector<128x128xf32>
    %c0_33 = arith.constant 0 : index
    %c0_34 = arith.constant 0 : index
    %80 = vector.load %arg11[%c0_33, %c0_34] : memref<1x128xf32, #tpu.memory_space<vmem>>, vector<1x128xf32>
    %81 = vector.broadcast %80 : vector<1x128xf32> to vector<128x128xf32>
    %82 = arith.addf %79, %81 : vector<128x128xf32>
    %cst_35 = arith.constant 5.000000e-01 : f32
    %83 = vector.broadcast %cst_35 : f32 to vector<128x128xf32>
    %84 = arith.mulf %83, %82 : vector<128x128xf32>
    %cst_36 = arith.constant 0.707106769 : f32
    %85 = vector.broadcast %cst_36 : f32 to vector<128x128xf32>
    %86 = arith.mulf %82, %85 : vector<128x128xf32>
    %87 = math.absf %86 : vector<128x128xf32>
    %cst_37 = arith.constant 0.327591091 : f32
    %88 = vector.broadcast %cst_37 : f32 to vector<128x128xf32>
    %89 = arith.mulf %88, %87 : vector<128x128xf32>
    %cst_38 = arith.constant 1.000000e+00 : f32
    %90 = vector.broadcast %cst_38 : f32 to vector<128x128xf32>
    %91 = arith.addf %90, %89 : vector<128x128xf32>
    %cst_39 = arith.constant 1.000000e+00 : f32
    %92 = vector.broadcast %cst_39 : f32 to vector<128x128xf32>
    %93 = arith.divf %92, %91 : vector<128x128xf32>
    %cst_40 = arith.constant 1.06140542 : f32
    %94 = vector.broadcast %cst_40 : f32 to vector<128x128xf32>
    %95 = arith.mulf %94, %93 : vector<128x128xf32>
    %cst_41 = arith.constant -1.45315206 : f32
    %96 = vector.broadcast %cst_41 : f32 to vector<128x128xf32>
    %97 = arith.addf %95, %96 : vector<128x128xf32>
    %98 = arith.mulf %97, %93 : vector<128x128xf32>
    %cst_42 = arith.constant 1.42141378 : f32
    %99 = vector.broadcast %cst_42 : f32 to vector<128x128xf32>
    %100 = arith.addf %98, %99 : vector<128x128xf32>
    %101 = arith.mulf %100, %93 : vector<128x128xf32>
    %cst_43 = arith.constant -0.284496725 : f32
    %102 = vector.broadcast %cst_43 : f32 to vector<128x128xf32>
    %103 = arith.addf %101, %102 : vector<128x128xf32>
    %104 = arith.mulf %103, %93 : vector<128x128xf32>
    %cst_44 = arith.constant 0.254829586 : f32
    %105 = vector.broadcast %cst_44 : f32 to vector<128x128xf32>
    %106 = arith.addf %104, %105 : vector<128x128xf32>
    %107 = arith.mulf %106, %93 : vector<128x128xf32>
    %cst_45 = arith.constant 0.000000e+00 : f32
    %108 = vector.broadcast %cst_45 : f32 to vector<128x128xf32>
    %109 = arith.subf %108, %87 : vector<128x128xf32>
    %110 = arith.mulf %109, %87 : vector<128x128xf32>
    %111 = math.exp %110 : vector<128x128xf32>
    %112 = arith.mulf %107, %111 : vector<128x128xf32>
    %cst_46 = arith.constant 1.000000e+00 : f32
    %113 = vector.broadcast %cst_46 : f32 to vector<128x128xf32>
    %114 = arith.subf %113, %112 : vector<128x128xf32>
    %cst_47 = arith.constant 0.000000e+00 : f32
    %115 = vector.broadcast %cst_47 : f32 to vector<128x128xf32>
    %116 = arith.cmpf olt, %86, %115 : vector<128x128xf32>
    %cst_48 = arith.constant 0.000000e+00 : f32
    %117 = vector.broadcast %cst_48 : f32 to vector<128x128xf32>
    %118 = arith.subf %117, %114 : vector<128x128xf32>
    %119 = arith.select %116, %118, %114 : vector<128x128xi1>, vector<128x128xf32>
    %cst_49 = arith.constant 1.000000e+00 : f32
    %120 = vector.broadcast %cst_49 : f32 to vector<128x128xf32>
    %121 = arith.addf %120, %119 : vector<128x128xf32>
    %122 = arith.mulf %84, %121 : vector<128x128xf32>
    %123 = arith.truncf %122 : vector<128x128xf32> to vector<128x128xbf16>
    %c0_50 = arith.constant 0 : index
    %c0_51 = arith.constant 0 : index
    %124 = vector.load %arg12[%c0_50, %c0_51] : memref<128x32xbf16, #tpu.memory_space<vmem>>, vector<128x32xbf16>
    %cst_52 = arith.constant dense<0.000000e+00> : vector<128x32xf32>
    %125 = tpu.matmul %123, %124, %cst_52 {dimension_numbers = #tpu.dot_dimension_numbers<[1], [0], [0], [1], [0, 0, 1, 1], [], []>} : vector<128x128xbf16>, vector<128x32xbf16>, vector<128x32xf32> -> vector<128x32xf32>
    %c0_53 = arith.constant 0 : index
    %c0_54 = arith.constant 0 : index
    %126 = vector.load %arg13[%c0_53, %c0_54] : memref<1x32xf32, #tpu.memory_space<vmem>>, vector<1x32xf32>
    %127 = vector.broadcast %126 : vector<1x32xf32> to vector<128x32xf32>
    %128 = arith.addf %125, %127 : vector<128x32xf32>
    %129 = arith.addf %0, %128 : vector<128x32xf32>
    %c0_55 = arith.constant 0 : index
    %c0_56 = arith.constant 0 : index
    %130 = vector.load %arg14[%c0_55, %c0_56] : memref<128x32xf32, #tpu.memory_space<vmem>>, vector<128x32xf32>
    tpu.vector_store %arg14[%c0_55, %c0_56], %129 {strides = array<i32>} : memref<128x32xf32, #tpu.memory_space<vmem>>, vector<128x32xf32>,
    return
  }
  func.func @transform_0(%arg0: i32) -> (i32, i32) {
    %c0_i32 = arith.constant 0 : i32
    %c0_i32_0 = arith.constant 0 : i32
    return %arg0, %c0_i32 : i32, i32
  }
  func.func @transform_1(%arg0: i32) -> (i32, i32) {
    %c0_i32 = arith.constant 0 : i32
    %c0_i32_0 = arith.constant 0 : i32
    %c0_i32_1 = arith.constant 0 : i32
    return %c0_i32, %c0_i32_0 : i32, i32
  }
  func.func @transform_2(%arg0: i32) -> (i32, i32) {
    %c0_i32 = arith.constant 0 : i32
    %c0_i32_0 = arith.constant 0 : i32
    %c0_i32_1 = arith.constant 0 : i32
    return %c0_i32, %c0_i32_0 : i32, i32
  }
  func.func @transform_3(%arg0: i32) -> (i32, i32) {
    %c0_i32 = arith.constant 0 : i32
    %c0_i32_0 = arith.constant 0 : i32
    %c0_i32_1 = arith.constant 0 : i32
    return %c0_i32, %c0_i32_0 : i32, i32
  }
  func.func @transform_4(%arg0: i32) -> (i32, i32) {
    %c0_i32 = arith.constant 0 : i32
    %c0_i32_0 = arith.constant 0 : i32
    %c0_i32_1 = arith.constant 0 : i32
    return %c0_i32, %c0_i32_0 : i32, i32
  }
  func.func @transform_5(%arg0: i32) -> (i32, i32) {
    %c0_i32 = arith.constant 0 : i32
    %c0_i32_0 = arith.constant 0 : i32
    %c0_i32_1 = arith.constant 0 : i32
    return %c0_i32, %c0_i32_0 : i32, i32
  }
  func.func @transform_6(%arg0: i32) -> (i32, i32) {
    %c0_i32 = arith.constant 0 : i32
    %c0_i32_0 = arith.constant 0 : i32
    %c0_i32_1 = arith.constant 0 : i32
    return %c0_i32, %c0_i32_0 : i32, i32
  }
  func.func @transform_7(%arg0: i32) -> (i32, i32) {
    %c0_i32 = arith.constant 0 : i32
    %c0_i32_0 = arith.constant 0 : i32
    %c0_i32_1 = arith.constant 0 : i32
    return %c0_i32, %c0_i32_0 : i32, i32
  }
  func.func @transform_8(%arg0: i32) -> (i32, i32) {
    %c0_i32 = arith.constant 0 : i32
    %c0_i32_0 = arith.constant 0 : i32
    %c0_i32_1 = arith.constant 0 : i32
    return %c0_i32, %c0_i32_0 : i32, i32
  }
  func.func @transform_9(%arg0: i32) -> (i32, i32) {
    %c0_i32 = arith.constant 0 : i32
    %c0_i32_0 = arith.constant 0 : i32
    %c0_i32_1 = arith.constant 0 : i32
    return %c0_i32, %c0_i32_0 : i32, i32
  }
  func.func @transform_10(%arg0: i32) -> (i32, i32) {
    %c0_i32 = arith.constant 0 : i32
    %c0_i32_0 = arith.constant 0 : i32
    %c0_i32_1 = arith.constant 0 : i32
    return %c0_i32, %c0_i32_0 : i32, i32
  }
  func.func @transform_11(%arg0: i32) -> (i32, i32) {
    %c0_i32 = arith.constant 0 : i32
    %c0_i32_0 = arith.constant 0 : i32
    %c0_i32_1 = arith.constant 0 : i32
    return %c0_i32, %c0_i32_0 : i32, i32
  }
  func.func @transform_12(%arg0: i32) -> (i32, i32) {
    %c0_i32 = arith.constant 0 : i32
    %c0_i32_0 = arith.constant 0 : i32
    %c0_i32_1 = arith.constant 0 : i32
    return %c0_i32, %c0_i32_0 : i32, i32
  }
  func.func @transform_13(%arg0: i32) -> (i32, i32) {
    %c0_i32 = arith.constant 0 : i32
    %c0_i32_0 = arith.constant 0 : i32
    return %arg0, %c0_i32 : i32, i32
  }
}

</mosaic_0001>

<llo_original>
// kernel: tpu_custom_call.1
$region0: #{tpu_custom_call.1}
  #allocation0 [shape = 'u32[]', space=smem, size = 0x4, offset = 0x4, fixed_abs, tag = 'smem constant byte address 0x4 - core index']
  #allocation1 [shape = 'u32[144,128]{1,0:T(1,128)}', space=vmem, size = 0x12000, scoped, tag = 'internal scratch']
  %s0 = inlined_call_operand.vmem [shape: f32[128,32], index: 0, kind: input, shape index: {}]
  %s1 = inlined_call_operand.vmem [shape: f32[1,32], index: 1, kind: input, shape index: {}]
  %s2 = inlined_call_operand.vmem [shape: f32[1,32], index: 2, kind: input, shape index: {}]
  %s3 = inlined_call_operand.vmem [shape: f32[1,32], index: 3, kind: input, shape index: {}]
  %s4 = inlined_call_operand.vmem [shape: f32[1,32], index: 4, kind: input, shape index: {}]
  %s5 = inlined_call_operand.vmem [shape: bf16[80,64], index: 5, kind: input, shape index: {}]
  %s6 = inlined_call_operand.vmem [shape: f32[40,32], index: 6, kind: input, shape index: {}]
  %s7 = inlined_call_operand.vmem [shape: f32[40,32], index: 7, kind: input, shape index: {}]
  %s8 = inlined_call_operand.vmem [shape: bf16[64,80], index: 8, kind: input, shape index: {}]
  %s9 = inlined_call_operand.vmem [shape: bf16[32,128], index: 9, kind: input, shape index: {}]
  %s10 = inlined_call_operand.vmem [shape: f32[1,128], index: 10, kind: input, shape index: {}]
  %s11 = inlined_call_operand.vmem [shape: bf16[128,32], index: 11, kind: input, shape index: {}]
  %s12 = inlined_call_operand.vmem [shape: f32[1,32], index: 12, kind: input, shape index: {}]
  %s13 = inlined_call_operand.vmem [shape: f32[128,32], index: 13, kind: output, shape index: {}]
  %s14 = sld [smem:[#allocation0]]
  $region62: #{tpu_custom_call.1} parent=0
    _
  %s16 = ssub.s32 1, %s14
  %s17 = scalar_select 0, %s16, %s14
  // Predicated region
  $region2: #{tpu_custom_call.1} parent=0 // pred_check
    _
  $region3: #{tpu_custom_call.1} parent=0 // pred_check_branch
    %19 = sbr.rel (0) target = $region5
  $region4: #{tpu_custom_call.1} parent=0 // pred_region
    _
  $region5: #{tpu_custom_call.1} parent=0 // pred_fallthru
    _
  // Predicated region
  $region6: #{tpu_custom_call.1} parent=0 // pred_check
    _
  $region7: #{tpu_custom_call.1} parent=0 // pred_check_branch
    %21 = sbr.rel (0) target = $region9
  $region8: #{tpu_custom_call.1} parent=0 // pred_region
    _
  $region9: #{tpu_custom_call.1} parent=0 // pred_fallthru
    _
  // Predicated region
  $region10: #{tpu_custom_call.1} parent=0 // pred_check
    _
  $region11: #{tpu_custom_call.1} parent=0 // pred_check_branch
    %23 = sbr.rel (0) target = $region13
  $region12: #{tpu_custom_call.1} parent=0 // pred_region
    _
  $region13: #{tpu_custom_call.1} parent=0 // pred_fallthru
    _
  // Predicated region
  $region14: #{tpu_custom_call.1} parent=0 // pred_check
    _
  $region15: #{tpu_custom_call.1} parent=0 // pred_check_branch
    %25 = sbr.rel (0) target = $region17
  $region16: #{tpu_custom_call.1} parent=0 // pred_region
    _
  $region17: #{tpu_custom_call.1} parent=0 // pred_fallthru
    _
  // Predicated region
  $region18: #{tpu_custom_call.1} parent=0 // pred_check
    _
  $region19: #{tpu_custom_call.1} parent=0 // pred_check_branch
    %27 = sbr.rel (0) target = $region21
  $region20: #{tpu_custom_call.1} parent=0 // pred_region
    _
  $region21: #{tpu_custom_call.1} parent=0 // pred_fallthru
    _
  // Predicated region
  $region22: #{tpu_custom_call.1} parent=0 // pred_check
    _
  $region23: #{tpu_custom_call.1} parent=0 // pred_check_branch
    %29 = sbr.rel (0) target = $region25
  $region24: #{tpu_custom_call.1} parent=0 // pred_region
    _
  $region25: #{tpu_custom_call.1} parent=0 // pred_fallthru
    _
  // Predicated region
  $region26: #{tpu_custom_call.1} parent=0 // pred_check
    _
  $region27: #{tpu_custom_call.1} parent=0 // pred_check_branch
    %31 = sbr.rel (0) target = $region29
  $region28: #{tpu_custom_call.1} parent=0 // pred_region
    _
  $region29: #{tpu_custom_call.1} parent=0 // pred_fallthru
    _
  // Predicated region
  $region30: #{tpu_custom_call.1} parent=0 // pred_check
    _
  $region31: #{tpu_custom_call.1} parent=0 // pred_check_branch
    %33 = sbr.rel (0) target = $region33
  $region32: #{tpu_custom_call.1} parent=0 // pred_region
    _
  $region33: #{tpu_custom_call.1} parent=0 // pred_fallthru
    _
  // Predicated region
  $region34: #{tpu_custom_call.1} parent=0 // pred_check
    _
  $region35: #{tpu_custom_call.1} parent=0 // pred_check_branch
    %35 = sbr.rel (0) target = $region37
  $region36: #{tpu_custom_call.1} parent=0 // pred_region
    _
  $region37: #{tpu_custom_call.1} parent=0 // pred_fallthru
    _
  // Predicated region
  $region38: #{tpu_custom_call.1} parent=0 // pred_check
    _
  $region39: #{tpu_custom_call.1} parent=0 // pred_check_branch
    %37 = sbr.rel (0) target = $region41
  $region40: #{tpu_custom_call.1} parent=0 // pred_region
    _
  $region41: #{tpu_custom_call.1} parent=0 // pred_fallthru
    _
  // Predicated region
  $region42: #{tpu_custom_call.1} parent=0 // pred_check
    _
  $region43: #{tpu_custom_call.1} parent=0 // pred_check_branch
    %39 = sbr.rel (0) target = $region45
  $region44: #{tpu_custom_call.1} parent=0 // pred_region
    _
  $region45: #{tpu_custom_call.1} parent=0 // pred_fallthru
    _
  // Predicated region
  $region46: #{tpu_custom_call.1} parent=0 // pred_check
    _
  $region47: #{tpu_custom_call.1} parent=0 // pred_check_branch
    %41 = sbr.rel (0) target = $region49
  $region48: #{tpu_custom_call.1} parent=0 // pred_region
    _
  $region49: #{tpu_custom_call.1} parent=0 // pred_fallthru
    _
  // Predicated region
  $region50: #{tpu_custom_call.1} parent=0 // pred_check
    _
  $region51: #{tpu_custom_call.1} parent=0 // pred_check_branch
    %43 = sbr.rel (0) target = $region53
  $region52: #{tpu_custom_call.1} parent=0 // pred_region
    _
  $region53: #{tpu_custom_call.1} parent=0 // pred_fallthru
    _
  %v45 = vld [vmem:[%s0] sm:$0xff]
  %v46 = vld [vmem:[%s0 + $0x8] sm:$0xff]
  %v47 = vld [vmem:[%s0 + $0x10] sm:$0xff]
  %v48 = vld [vmem:[%s0 + $0x18] sm:$0xff]
  %v49 = vld [vmem:[%s0 + $0x20] sm:$0xff]
  %v50 = vld [vmem:[%s0 + $0x28] sm:$0xff]
  %v51 = vld [vmem:[%s0 + $0x30] sm:$0xff]
  %v52 = vld [vmem:[%s0 + $0x38] sm:$0xff]
  %v53 = vld [vmem:[%s0 + $0x40] sm:$0xff]
  %v54 = vld [vmem:[%s0 + $0x48] sm:$0xff]
  %v55 = vld [vmem:[%s0 + $0x50] sm:$0xff]
  %v56 = vld [vmem:[%s0 + $0x58] sm:$0xff]
  %v57 = vld [vmem:[%s0 + $0x60] sm:$0xff]
  %v58 = vld [vmem:[%s0 + $0x68] sm:$0xff]
  %v59 = vld [vmem:[%s0 + $0x70] sm:$0xff]
  %v60 = vld [vmem:[%s0 + $0x78] sm:$0xff]
  %v61 = vld [vmem:[%s1] sm:$0x1]
  %v62 = vld [vmem:[%s2] sm:$0x1]
  %vm63 = vcmask 261120
  %v64 = vsel %vm63, %v45, 0.0
  %65 = vadd.xlane.f32.xlu0 %v64
  %v66 = vpop.xlane.xlu0 %65
  %v67 = vsel %vm63, %v46, 0.0
  %68 = vadd.xlane.f32.xlu0 %v67
  %v69 = vpop.xlane.xlu0 %68
  %v70 = vsel %vm63, %v47, 0.0
  %71 = vadd.xlane.f32.xlu0 %v70
  %v72 = vpop.xlane.xlu0 %71
  %v73 = vsel %vm63, %v48, 0.0
  %74 = vadd.xlane.f32.xlu0 %v73
  %v75 = vpop.xlane.xlu0 %74
  %v76 = vsel %vm63, %v49, 0.0
  %77 = vadd.xlane.f32.xlu0 %v76
  %v78 = vpop.xlane.xlu0 %77
  %v79 = vsel %vm63, %v50, 0.0
  %80 = vadd.xlane.f32.xlu0 %v79
  %v81 = vpop.xlane.xlu0 %80
  %v82 = vsel %vm63, %v51, 0.0
  %83 = vadd.xlane.f32.xlu0 %v82
  %v84 = vpop.xlane.xlu0 %83
  %v85 = vsel %vm63, %v52, 0.0
  %86 = vadd.xlane.f32.xlu0 %v85
  %v87 = vpop.xlane.xlu0 %86
  %v88 = vsel %vm63, %v53, 0.0
  %89 = vadd.xlane.f32.xlu0 %v88
  %v90 = vpop.xlane.xlu0 %89
  %v91 = vsel %vm63, %v54, 0.0
  %92 = vadd.xlane.f32.xlu0 %v91
  %v93 = vpop.xlane.xlu0 %92
  %v94 = vsel %vm63, %v55, 0.0
  %95 = vadd.xlane.f32.xlu0 %v94
  %v96 = vpop.xlane.xlu0 %95
  %v97 = vsel %vm63, %v56, 0.0
  %98 = vadd.xlane.f32.xlu0 %v97
  %v99 = vpop.xlane.xlu0 %98
  %v100 = vsel %vm63, %v57, 0.0
  %101 = vadd.xlane.f32.xlu0 %v100
  %v102 = vpop.xlane.xlu0 %101
  %v103 = vsel %vm63, %v58, 0.0
  %104 = vadd.xlane.f32.xlu0 %v103
  %v105 = vpop.xlane.xlu0 %104
  %v106 = vsel %vm63, %v59, 0.0
  %107 = vadd.xlane.f32.xlu0 %v106
  %v108 = vpop.xlane.xlu0 %107
  %v109 = vsel %vm63, %v60, 0.0
  %110 = vadd.xlane.f32.xlu0 %v109
  %v111 = vpop.xlane.xlu0 %110
  %v112 = vrcp.pop 32.0
  %v113 = vmul.f32 %v66, %v112
  %v114 = vmul.f32 %v69, %v112
  %v115 = vmul.f32 %v72, %v112
  %v116 = vmul.f32 %v75, %v112
  %v117 = vmul.f32 %v78, %v112
  %v118 = vmul.f32 %v81, %v112
  %v119 = vmul.f32 %v84, %v112
  %v120 = vmul.f32 %v87, %v112
  %v121 = vmul.f32 %v90, %v112
  %v122 = vmul.f32 %v93, %v112
  %v123 = vmul.f32 %v96, %v112
  %v124 = vmul.f32 %v99, %v112
  %v125 = vmul.f32 %v102, %v112
  %v126 = vmul.f32 %v105, %v112
  %v127 = vmul.f32 %v108, %v112
  %v128 = vmul.f32 %v111, %v112
  %v129 = vsub.f32 %v45, %v113
  %v130 = vsub.f32 %v46, %v114
  %v131 = vsub.f32 %v47, %v115
  %v132 = vsub.f32 %v48, %v116
  %v133 = vsub.f32 %v49, %v117
  %v134 = vsub.f32 %v50, %v118
  %v135 = vsub.f32 %v51, %v119
  %v136 = vsub.f32 %v52, %v120
  %v137 = vsub.f32 %v53, %v121
  %v138 = vsub.f32 %v54, %v122
  %v139 = vsub.f32 %v55, %v123
  %v140 = vsub.f32 %v56, %v124
  %v141 = vsub.f32 %v57, %v125
  %v142 = vsub.f32 %v58, %v126
  %v143 = vsub.f32 %v59, %v127
  %v144 = vsub.f32 %v60, %v128
  %v145 = vmul.f32 %v129, %v129
  %v146 = vmul.f32 %v130, %v130
  %v147 = vmul.f32 %v131, %v131
  %v148 = vmul.f32 %v132, %v132
  %v149 = vmul.f32 %v133, %v133
  %v150 = vmul.f32 %v134, %v134
  %v151 = vmul.f32 %v135, %v135
  %v152 = vmul.f32 %v136, %v136
  %v153 = vmul.f32 %v137, %v137
  %v154 = vmul.f32 %v138, %v138
  %v155 = vmul.f32 %v139, %v139
  %v156 = vmul.f32 %v140, %v140
  %v157 = vmul.f32 %v141, %v141
  %v158 = vmul.f32 %v142, %v142
  %v159 = vmul.f32 %v143, %v143
  %v160 = vmul.f32 %v144, %v144
  %v161 = vsel %vm63, %v145, 0.0
  %162 = vadd.xlane.f32.xlu0 %v161
  %v163 = vpop.xlane.xlu0 %162
  %v164 = vsel %vm63, %v146, 0.0
  %165 = vadd.xlane.f32.xlu0 %v164
  %v166 = vpop.xlane.xlu0 %165
  %v167 = vsel %vm63, %v147, 0.0
  %168 = vadd.xlane.f32.xlu0 %v167
  %v169 = vpop.xlane.xlu0 %168
  %v170 = vsel %vm63, %v148, 0.0
  %171 = vadd.xlane.f32.xlu0 %v170
  %v172 = vpop.xlane.xlu0 %171
  %v173 = vsel %vm63, %v149, 0.0
  %174 = vadd.xlane.f32.xlu0 %v173
  %v175 = vpop.xlane.xlu0 %174
  %v176 = vsel %vm63, %v150, 0.0
  %177 = vadd.xlane.f32.xlu0 %v176
  %v178 = vpop.xlane.xlu0 %177
  %v179 = vsel %vm63, %v151, 0.0
  %180 = vadd.xlane.f32.xlu0 %v179
  %v181 = vpop.xlane.xlu0 %180
  %v182 = vsel %vm63, %v152, 0.0
  %183 = vadd.xlane.f32.xlu0 %v182
  %v184 = vpop.xlane.xlu0 %183
  %v185 = vsel %vm63, %v153, 0.0
  %186 = vadd.xlane.f32.xlu0 %v185
  %v187 = vpop.xlane.xlu0 %186
  %v188 = vsel %vm63, %v154, 0.0
  %189 = vadd.xlane.f32.xlu0 %v188
  %v190 = vpop.xlane.xlu0 %189
  %v191 = vsel %vm63, %v155, 0.0
  %192 = vadd.xlane.f32.xlu0 %v191
  %v193 = vpop.xlane.xlu0 %192
  %v194 = vsel %vm63, %v156, 0.0
  %195 = vadd.xlane.f32.xlu0 %v194
  %v196 = vpop.xlane.xlu0 %195
  %v197 = vsel %vm63, %v157, 0.0
  %198 = vadd.xlane.f32.xlu0 %v197
  %v199 = vpop.xlane.xlu0 %198
  %v200 = vsel %vm63, %v158, 0.0
  %201 = vadd.xlane.f32.xlu0 %v200
  %v202 = vpop.xlane.xlu0 %201
  %v203 = vsel %vm63, %v159, 0.0
  %204 = vadd.xlane.f32.xlu0 %v203
  %v205 = vpop.xlane.xlu0 %204
  %v206 = vsel %vm63, %v160, 0.0
  %207 = vadd.xlane.f32.xlu0 %v206
  %v208 = vpop.xlane.xlu0 %207
  %v209 = vmul.f32 %v163, %v112
  %v210 = vmul.f32 %v166, %v112
  %v211 = vmul.f32 %v169, %v112
  %v212 = vmul.f32 %v172, %v112
  %v213 = vmul.f32 %v175, %v112
  %v214 = vmul.f32 %v178, %v112
  %v215 = vmul.f32 %v181, %v112
  %v216 = vmul.f32 %v184, %v112
  %v217 = vmul.f32 %v187, %v112
  %v218 = vmul.f32 %v190, %v112
  %v219 = vmul.f32 %v193, %v112
  %v220 = vmul.f32 %v196, %v112
  %v221 = vmul.f32 %v199, %v112
  %v222 = vmul.f32 %v202, %v112
  %v223 = vmul.f32 %v205, %v112
  %v224 = vmul.f32 %v208, %v112
  %v225 = vadd.f32 %v209, 1e-05
  %v226 = vadd.f32 %v210, 1e-05
  %v227 = vadd.f32 %v211, 1e-05
  %v228 = vadd.f32 %v212, 1e-05
  %v229 = vadd.f32 %v213, 1e-05
  %v230 = vadd.f32 %v214, 1e-05
  %v231 = vadd.f32 %v215, 1e-05
  %v232 = vadd.f32 %v216, 1e-05
  %v233 = vadd.f32 %v217, 1e-05
  %v234 = vadd.f32 %v218, 1e-05
  %v235 = vadd.f32 %v219, 1e-05
  %v236 = vadd.f32 %v220, 1e-05
  %v237 = vadd.f32 %v221, 1e-05
  %v238 = vadd.f32 %v222, 1e-05
  %v239 = vadd.f32 %v223, 1e-05
  %v240 = vadd.f32 %v224, 1e-05
  %v241 = vrsqrt.pop %v225
  %v242 = vrsqrt.pop %v226
  %v243 = vrsqrt.pop %v227
  %v244 = vrsqrt.pop %v228
  %v245 = vrsqrt.pop %v229
  %v246 = vrsqrt.pop %v230
  %v247 = vrsqrt.pop %v231
  %v248 = vrsqrt.pop %v232
  %v249 = vrsqrt.pop %v233
  %v250 = vrsqrt.pop %v234
  %v251 = vrsqrt.pop %v235
  %v252 = vrsqrt.pop %v236
  %v253 = vrsqrt.pop %v237
  %v254 = vrsqrt.pop %v238
  %v255 = vrsqrt.pop %v239
  %v256 = vrsqrt.pop %v240
  %v257 = vmul.f32 %v129, %v241
  %v258 = vmul.f32 %v130, %v242
  %v259 = vmul.f32 %v131, %v243
  %v260 = vmul.f32 %v132, %v244
  %v261 = vmul.f32 %v133, %v245
  %v262 = vmul.f32 %v134, %v246
  %v263 = vmul.f32 %v135, %v247
  %v264 = vmul.f32 %v136, %v248
  %v265 = vmul.f32 %v137, %v249
  %v266 = vmul.f32 %v138, %v250
  %v267 = vmul.f32 %v139, %v251
  %v268 = vmul.f32 %v140, %v252
  %v269 = vmul.f32 %v141, %v253
  %v270 = vmul.f32 %v142, %v254
  %v271 = vmul.f32 %v143, %v255
  %v272 = vmul.f32 %v144, %v256
  %v274 = vlaneseq
  %v275 = vshrl.u32 %v274, 7
  %v276 = vsub.s32 0, %v275
  %v277 = vrot.slane %v61, %v276
  %v279 = vmul.f32 %v257, %v277
  %v280 = vmul.f32 %v258, %v277
  %v281 = vmul.f32 %v259, %v277
  %v282 = vmul.f32 %v260, %v277
  %v283 = vmul.f32 %v261, %v277
  %v284 = vmul.f32 %v262, %v277
  %v285 = vmul.f32 %v263, %v277
  %v286 = vmul.f32 %v264, %v277
  %v287 = vmul.f32 %v265, %v277
  %v288 = vmul.f32 %v266, %v277
  %v289 = vmul.f32 %v267, %v277
  %v290 = vmul.f32 %v268, %v277
  %v291 = vmul.f32 %v269, %v277
  %v292 = vmul.f32 %v270, %v277
  %v293 = vmul.f32 %v271, %v277
  %v294 = vmul.f32 %v272, %v277
  %v296 = vlaneseq
  %v297 = vshrl.u32 %v296, 7
  %v298 = vsub.s32 0, %v297
  %v299 = vrot.slane %v62, %v298
  %v301 = vadd.f32 %v279, %v299
  %v302 = vadd.f32 %v280, %v299
  %v303 = vadd.f32 %v281, %v299
  %v304 = vadd.f32 %v282, %v299
  %v305 = vadd.f32 %v283, %v299
  %v306 = vadd.f32 %v284, %v299
  %v307 = vadd.f32 %v285, %v299
  %v308 = vadd.f32 %v286, %v299
  %v309 = vadd.f32 %v287, %v299
  %v310 = vadd.f32 %v288, %v299
  %v311 = vadd.f32 %v289, %v299
  %v312 = vadd.f32 %v290, %v299
  %v313 = vadd.f32 %v291, %v299
  %v314 = vadd.f32 %v292, %v299
  %v315 = vadd.f32 %v293, %v299
  %v316 = vadd.f32 %v294, %v299
  %v317 = vld [vmem:[%s5] sm:$0xf]
  %v318 = vld [vmem:[%s5 + $0x4] sm:$0xf]
  %v319 = vld [vmem:[%s5 + $0x8] sm:$0xf]
  %v320 = vld [vmem:[%s5 + $0xc] sm:$0xf]
  %v321 = vld [vmem:[%s5 + $0x10] sm:$0xf]
  %v322 = vld [vmem:[%s5 + $0x14] sm:$0xf]
  %v323 = vld [vmem:[%s5 + $0x18] sm:$0xf]
  %v324 = vld [vmem:[%s5 + $0x1c] sm:$0xf]
  %v325 = vld [vmem:[%s5 + $0x20] sm:$0xf]
  %v326 = vld [vmem:[%s5 + $0x24] sm:$0xf]
  %v327 = vld [vmem:[%s8] sm:$0xf]
  %v328 = vld [vmem:[%s8 + $0x4] sm:$0xf]
  %v329 = vld [vmem:[%s8 + $0x8] sm:$0xf]
  %v330 = vld [vmem:[%s8 + $0xc] sm:$0xf]
  %v331 = vld [vmem:[%s8 + $0x10] sm:$0xf]
  %v332 = vld [vmem:[%s8 + $0x14] sm:$0xf]
  %v333 = vld [vmem:[%s8 + $0x18] sm:$0xf]
  %v334 = vld [vmem:[%s8 + $0x1c] sm:$0xf]
  %v335 = vld [vmem:[%s6] sm:$0xff]
  %v336 = vld [vmem:[%s6 + $0x8] sm:$0xff]
  %v337 = vld [vmem:[%s6 + $0x10] sm:$0xff]
  %v338 = vld [vmem:[%s6 + $0x18] sm:$0xff]
  %v339 = vld [vmem:[%s6 + $0x20] sm:$0xff]
  %v340 = vld [vmem:[%s7] sm:$0xff]
  %v341 = vld [vmem:[%s7 + $0x8] sm:$0xff]
  %v342 = vld [vmem:[%s7 + $0x10] sm:$0xff]
  %v343 = vld [vmem:[%s7 + $0x18] sm:$0xff]
  %v344 = vld [vmem:[%s7 + $0x20] sm:$0xff]
  %v345 = vpack.c.bf16 %v302, %v301
  %v346 = vpack.c.bf16 %v304, %v303
  %v347 = vpack.c.bf16 %v306, %v305
  %v348 = vpack.c.bf16 %v308, %v307
  %v349 = vpack.c.bf16 %v310, %v309
  %v350 = vpack.c.bf16 %v312, %v311
  %v351 = vpack.c.bf16 %v314, %v313
  %v352 = vpack.c.bf16 %v316, %v315
  %v363 = vunpack.c.l.b16 %v317
  %v364 = vunpack.c.l.b16 %v318
  %v365 = vunpack.c.l.b16 %v319
  %v366 = vunpack.c.l.b16 %v320
  %v367 = vunpack.c.l.b16 %v321
  %v368 = vunpack.c.l.b16 %v322
  %v369 = vunpack.c.l.b16 %v323
  %v370 = vunpack.c.l.b16 %v324
  %v371 = vunpack.c.l.b16 %v325
  %v372 = vunpack.c.l.b16 %v326
  %v373 = vpack.c.b16 %v364, %v363
  %v374 = vpack.c.b16 %v366, %v365
  %v375 = vpack.c.b16 %v368, %v367
  %v376 = vpack.c.b16 %v370, %v369
  %v377 = vpack.c.b16 %v372, %v371
  %vm378 = vcmask 523264
  %v380 = vsel %vm378, %v373, 0
  %v383 = vsel %vm378, %v374, 0
  %v386 = vsel %vm378, %v375, 0
  %v389 = vsel %vm378, %v376, 0
  %v392 = vsel %vm378, %v377, 0
  %394 = vmatprep.subr.bf16.mxu0 0
  %395 = vmatpush1.bf16.msra.mxu0 %v345
  %396 = vmatprep.subr.bf16.mxu0 0
  %397 = vmatpush1.bf16.msra.mxu0 %v346
  %398 = vmatprep.subr.bf16.mxu0 0
  %399 = vmatpush1.bf16.msra.mxu0 %v347
  %400 = vmatprep.subr.bf16.mxu0 0
  %401 = vmatpush1.bf16.msra.mxu0 %v348
  %402 = vmatprep.subr.bf16.mxu0 0
  %403 = vmatpush1.bf16.msra.mxu0 0
  %404 = vmatprep.subr.bf16.mxu0 0
  %405 = vmatpush1.bf16.msra.mxu0 0
  %406 = vmatprep.subr.bf16.mxu0 0
  %407 = vmatpush1.bf16.msra.mxu0 0
  %408 = vmatprep.subr.bf16.mxu0 0
  %409 = vmatpush1.bf16.msra.mxu0 0
  %410 = vmatprep.subr.bf16.mxu0 0
  %411 = vmatpush1.bf16.msra.mxu0 0
  %412 = vmatprep.subr.bf16.mxu0 0
  %413 = vmatpush1.bf16.msra.mxu0 0
  %414 = vmatprep.subr.bf16.mxu0 0
  %415 = vmatpush1.bf16.msra.mxu0 0
  %416 = vmatprep.subr.bf16.mxu0 0
  %417 = vmatpush1.bf16.msra.mxu0 0
  %418 = vmatprep.subr.bf16.mxu0 0
  %419 = vmatpush1.bf16.msra.mxu0 0
  %420 = vmatprep.subr.bf16.mxu0 0
  %421 = vmatpush1.bf16.msra.mxu0 0
  %422 = vmatprep.subr.bf16.mxu0 0
  %423 = vmatpush1.bf16.msra.mxu0 0
  %424 = vmatprep.subr.bf16.mxu0 0
  %425 = vmatpush1.bf16.msra.mxu0 0
  %426 = vmatprep.mubr.bf16.mxu0 0
  %427 = vmatmul.mubr.bf16.gmra.mrb[0].mxu0 %v380
  %v428 = vpop.f32.mrb[0].mxu0
  %v429 = vadd.f32 0.0, %v428
  %v430 = vpop.f32.mrb[0].mxu0
  %v431 = vpop.f32.mrb[0].mxu0
  %v432 = vadd.f32 0.0, %v431
  %v433 = vpop.f32.mrb[0].mxu0
  %434 = vmatprep.mubr.bf16.mxu0 0
  %435 = vmatmul.mubr.bf16.gmra.mrb[0].mxu0 %v383
  %v436 = vpop.f32.mrb[0].mxu0
  %v437 = vadd.f32 0.0, %v436
  %v438 = vpop.f32.mrb[0].mxu0
  %v439 = vpop.f32.mrb[0].mxu0
  %v440 = vadd.f32 0.0, %v439
  %v441 = vpop.f32.mrb[0].mxu0
  %442 = vmatprep.mubr.bf16.mxu0 0
  %443 = vmatmul.mubr.bf16.gmra.mrb[0].mxu0 %v386
  %v444 = vpop.f32.mrb[0].mxu0
  %v445 = vadd.f32 0.0, %v444
  %v446 = vpop.f32.mrb[0].mxu0
  %v447 = vpop.f32.mrb[0].mxu0
  %v448 = vadd.f32 0.0, %v447
  %v449 = vpop.f32.mrb[0].mxu0
  %450 = vmatprep.mubr.bf16.mxu0 0
  %451 = vmatmul.mubr.bf16.gmra.mrb[0].mxu0 %v389
  %v452 = vpop.f32.mrb[0].mxu0
  %v453 = vadd.f32 0.0, %v452
  %v454 = vpop.f32.mrb[0].mxu0
  %v455 = vpop.f32.mrb[0].mxu0
  %v456 = vadd.f32 0.0, %v455
  %v457 = vpop.f32.mrb[0].mxu0
  %458 = vmatprep.mubr.bf16.mxu0 0
  %459 = vmatmul.mubr.bf16.gmra.mrb[0].mxu0 %v392
  %v460 = vpop.f32.mrb[0].mxu0
  %v461 = vadd.f32 0.0, %v460
  %v462 = vpop.f32.mrb[0].mxu0
  %v463 = vpop.f32.mrb[0].mxu0
  %v464 = vadd.f32 0.0, %v463
  %v465 = vpop.f32.mrb[0].mxu0
  %466 = vdwg.mxu0
  %v467 = vmul.f32 %v429, %v335
  %v468 = vmul.f32 %v432, %v336
  %v469 = vmul.f32 %v437, %v337
  %v470 = vmul.f32 %v440, %v338
  %v471 = vmul.f32 %v445, %v339
  %v472 = vmul.f32 %v448, %v340
  %v473 = vmul.f32 %v453, %v341
  %v474 = vmul.f32 %v456, %v342
  %v475 = vmul.f32 %v461, %v343
  %v476 = vmul.f32 %v464, %v344
  %v477 = vsub.f32 %v467, %v472
  %v478 = vsub.f32 %v468, %v473
  %v479 = vsub.f32 %v469, %v474
  %v480 = vsub.f32 %v470, %v475
  %v481 = vsub.f32 %v471, %v476
  %v482 = vmul.f32 %v429, %v340
  %v483 = vmul.f32 %v432, %v341
  %v484 = vmul.f32 %v437, %v342
  %v485 = vmul.f32 %v440, %v343
  %v486 = vmul.f32 %v445, %v344
  %v487 = vmul.f32 %v448, %v335
  %v488 = vmul.f32 %v453, %v336
  %v489 = vmul.f32 %v456, %v337
  %v490 = vmul.f32 %v461, %v338
  %v491 = vmul.f32 %v464, %v339
  %v492 = vadd.f32 %v482, %v487
  %v493 = vadd.f32 %v483, %v488
  %v494 = vadd.f32 %v484, %v489
  %v495 = vadd.f32 %v485, %v490
  %v496 = vadd.f32 %v486, %v491
  %v497 = vpack.c.bf16 %v478, %v477
  %v498 = vpack.c.bf16 %v480, %v479
  %v499 = vpack.c.bf16 %v492, %v481
  %v500 = vpack.c.bf16 %v494, %v493
  %v501 = vpack.c.bf16 %v496, %v495
  %v510 = vunpack.c.l.b16 %v327
  %v511 = vunpack.c.l.b16 %v328
  %v512 = vunpack.c.l.b16 %v329
  %v513 = vunpack.c.l.b16 %v330
  %v514 = vunpack.c.l.b16 %v331
  %v515 = vunpack.c.l.b16 %v332
  %v516 = vunpack.c.l.b16 %v333
  %v517 = vunpack.c.l.b16 %v334
  %v518 = vpack.c.b16 %v511, %v510
  %v519 = vpack.c.b16 %v513, %v512
  %v520 = vpack.c.b16 %v515, %v514
  %v521 = vpack.c.b16 %v517, %v516
  %vm522 = vcmask 654336
  %v524 = vsel %vm522, %v518, 0
  %v527 = vsel %vm522, %v519, 0
  %v530 = vsel %vm522, %v520, 0
  %v533 = vsel %vm522, %v521, 0
  %535 = vmatprep.subr.bf16.mxu0 0
  %536 = vmatpush1.bf16.msra.mxu0 %v497
  %537 = vmatprep.subr.bf16.mxu0 0
  %538 = vmatpush1.bf16.msra.mxu0 %v498
  %539 = vmatprep.subr.bf16.mxu0 0
  %540 = vmatpush1.bf16.msra.mxu0 %v499
  %541 = vmatprep.subr.bf16.mxu0 0
  %542 = vmatpush1.bf16.msra.mxu0 %v500
  %543 = vmatprep.subr.bf16.mxu0 0
  %544 = vmatpush1.bf16.msra.mxu0 %v501
  %545 = vmatprep.subr.bf16.mxu0 0
  %546 = vmatpush1.bf16.msra.mxu0 0
  %547 = vmatprep.subr.bf16.mxu0 0
  %548 = vmatpush1.bf16.msra.mxu0 0
  %549 = vmatprep.subr.bf16.mxu0 0
  %550 = vmatpush1.bf16.msra.mxu0 0
  %551 = vmatprep.subr.bf16.mxu0 0
  %552 = vmatpush1.bf16.msra.mxu0 0
  %553 = vmatprep.subr.bf16.mxu0 0
  %554 = vmatpush1.bf16.msra.mxu0 0
  %555 = vmatprep.subr.bf16.mxu0 0
  %556 = vmatpush1.bf16.msra.mxu0 0
  %557 = vmatprep.subr.bf16.mxu0 0
  %558 = vmatpush1.bf16.msra.mxu0 0
  %559 = vmatprep.subr.bf16.mxu0 0
  %560 = vmatpush1.bf16.msra.mxu0 0
  %561 = vmatprep.subr.bf16.mxu0 0
  %562 = vmatpush1.bf16.msra.mxu0 0
  %563 = vmatprep.subr.bf16.mxu0 0
  %564 = vmatpush1.bf16.msra.mxu0 0
  %565 = vmatprep.subr.bf16.mxu0 0
  %566 = vmatpush1.bf16.msra.mxu0 0
  %567 = vmatprep.mubr.bf16.mxu0 0
  %568 = vmatmul.mubr.bf16.gmra.mrb[0].mxu0 %v524
  %v569 = vpop.f32.mrb[0].mxu0
  %v570 = vadd.f32 0.0, %v569
  %v571 = vpop.f32.mrb[0].mxu0
  %v572 = vpop.f32.mrb[0].mxu0
  %v573 = vadd.f32 0.0, %v572
  %v574 = vpop.f32.mrb[0].mxu0
  %575 = vmatprep.mubr.bf16.mxu0 0
  %576 = vmatmul.mubr.bf16.gmra.mrb[0].mxu0 %v527
  %v577 = vpop.f32.mrb[0].mxu0
  %v578 = vadd.f32 0.0, %v577
  %v579 = vpop.f32.mrb[0].mxu0
  %v580 = vpop.f32.mrb[0].mxu0
  %v581 = vadd.f32 0.0, %v580
  %v582 = vpop.f32.mrb[0].mxu0
  %583 = vmatprep.mubr.bf16.mxu0 0
  %584 = vmatmul.mubr.bf16.gmra.mrb[0].mxu0 %v530
  %v585 = vpop.f32.mrb[0].mxu0
  %v586 = vadd.f32 0.0, %v585
  %v587 = vpop.f32.mrb[0].mxu0
  %v588 = vpop.f32.mrb[0].mxu0
  %v589 = vadd.f32 0.0, %v588
  %v590 = vpop.f32.mrb[0].mxu0
  %591 = vmatprep.mubr.bf16.mxu0 0
  %592 = vmatmul.mubr.bf16.gmra.mrb[0].mxu0 %v533
  %v593 = vpop.f32.mrb[0].mxu0
  %v594 = vadd.f32 0.0, %v593
  %v595 = vpop.f32.mrb[0].mxu0
  %v596 = vpop.f32.mrb[0].mxu0
  %v597 = vadd.f32 0.0, %v596
  %v598 = vpop.f32.mrb[0].mxu0
  %599 = vdwg.mxu0
  %600 = vmatprep.subr.bf16.mxu0 0
  %601 = vmatpush1.bf16.msra.mxu0 %v349
  %602 = vmatprep.subr.bf16.mxu0 0
  %603 = vmatpush1.bf16.msra.mxu0 %v350
  %604 = vmatprep.subr.bf16.mxu0 0
  %605 = vmatpush1.bf16.msra.mxu0 %v351
  %606 = vmatprep.subr.bf16.mxu0 0
  %607 = vmatpush1.bf16.msra.mxu0 %v352
  %608 = vmatprep.subr.bf16.mxu0 0
  %609 = vmatpush1.bf16.msra.mxu0 0
  %610 = vmatprep.subr.bf16.mxu0 0
  %611 = vmatpush1.bf16.msra.mxu0 0
  %612 = vmatprep.subr.bf16.mxu0 0
  %613 = vmatpush1.bf16.msra.mxu0 0
  %614 = vmatprep.subr.bf16.mxu0 0
  %615 = vmatpush1.bf16.msra.mxu0 0
  %616 = vmatprep.subr.bf16.mxu0 0
  %617 = vmatpush1.bf16.msra.mxu0 0
  %618 = vmatprep.subr.bf16.mxu0 0
  %619 = vmatpush1.bf16.msra.mxu0 0
  %620 = vmatprep.subr.bf16.mxu0 0
  %621 = vmatpush1.bf16.msra.mxu0 0
  %622 = vmatprep.subr.bf16.mxu0 0
  %623 = vmatpush1.bf16.msra.mxu0 0
  %624 = vmatprep.subr.bf16.mxu0 0
  %625 = vmatpush1.bf16.msra.mxu0 0
  %626 = vmatprep.subr.bf16.mxu0 0
  %627 = vmatpush1.bf16.msra.mxu0 0
  %628 = vmatprep.subr.bf16.mxu0 0
  %629 = vmatpush1.bf16.msra.mxu0 0
  %630 = vmatprep.subr.bf16.mxu0 0
  %631 = vmatpush1.bf16.msra.mxu0 0
  %632 = vmatprep.mubr.bf16.mxu0 0
  %633 = vmatmul.mubr.bf16.gmra.mrb[0].mxu0 %v380
  %v634 = vpop.f32.mrb[0].mxu0
  %v635 = vadd.f32 0.0, %v634
  %v636 = vpop.f32.mrb[0].mxu0
  %v637 = vpop.f32.mrb[0].mxu0
  %v638 = vadd.f32 0.0, %v637
  %v639 = vpop.f32.mrb[0].mxu0
  %640 = vmatprep.mubr.bf16.mxu0 0
  %641 = vmatmul.mubr.bf16.gmra.mrb[0].mxu0 %v383
  %v642 = vpop.f32.mrb[0].mxu0
  %v643 = vadd.f32 0.0, %v642
  %v644 = vpop.f32.mrb[0].mxu0
  %v645 = vpop.f32.mrb[0].mxu0
  %v646 = vadd.f32 0.0, %v645
  %v647 = vpop.f32.mrb[0].mxu0
  %648 = vmatprep.mubr.bf16.mxu0 0
  %649 = vmatmul.mubr.bf16.gmra.mrb[0].mxu0 %v386
  %v650 = vpop.f32.mrb[0].mxu0
  %v651 = vadd.f32 0.0, %v650
  %v652 = vpop.f32.mrb[0].mxu0
  %v653 = vpop.f32.mrb[0].mxu0
  %v654 = vadd.f32 0.0, %v653
  %v655 = vpop.f32.mrb[0].mxu0
  %656 = vmatprep.mubr.bf16.mxu0 0
  %657 = vmatmul.mubr.bf16.gmra.mrb[0].mxu0 %v389
  %v658 = vpop.f32.mrb[0].mxu0
  %v659 = vadd.f32 0.0, %v658
  %v660 = vpop.f32.mrb[0].mxu0
  %v661 = vpop.f32.mrb[0].mxu0
  %v662 = vadd.f32 0.0, %v661
  %v663 = vpop.f32.mrb[0].mxu0
  %664 = vmatprep.mubr.bf16.mxu0 0
  %665 = vmatmul.mubr.bf16.gmra.mrb[0].mxu0 %v392
  %v666 = vpop.f32.mrb[0].mxu0
  %v667 = vadd.f32 0.0, %v666
  %v668 = vpop.f32.mrb[0].mxu0
  %v669 = vpop.f32.mrb[0].mxu0
  %v670 = vadd.f32 0.0, %v669
  %v671 = vpop.f32.mrb[0].mxu0
  %672 = vdwg.mxu0
  %v673 = vmul.f32 %v635, %v335
  %v674 = vmul.f32 %v638, %v336
  %v675 = vmul.f32 %v643, %v337
  %v676 = vmul.f32 %v646, %v338
  %v677 = vmul.f32 %v651, %v339
  %v678 = vmul.f32 %v654, %v340
  %v679 = vmul.f32 %v659, %v341
  %v680 = vmul.f32 %v662, %v342
  %v681 = vmul.f32 %v667, %v343
  %v682 = vmul.f32 %v670, %v344
  %v683 = vsub.f32 %v673, %v678
  %v684 = vsub.f32 %v674, %v679
  %v685 = vsub.f32 %v675, %v680
  %v686 = vsub.f32 %v676, %v681
  %v687 = vsub.f32 %v677, %v682
  %v688 = vmul.f32 %v635, %v340
  %v689 = vmul.f32 %v638, %v341
  %v690 = vmul.f32 %v643, %v342
  %v691 = vmul.f32 %v646, %v343
  %v692 = vmul.f32 %v651, %v344
  %v693 = vmul.f32 %v654, %v335
  %v694 = vmul.f32 %v659, %v336
  %v695 = vmul.f32 %v662, %v337
  %v696 = vmul.f32 %v667, %v338
  %v697 = vmul.f32 %v670, %v339
  %v698 = vadd.f32 %v688, %v693
  %v699 = vadd.f32 %v689, %v694
  %v700 = vadd.f32 %v690, %v695
  %v701 = vadd.f32 %v691, %v696
  %v702 = vadd.f32 %v692, %v697
  %v703 = vpack.c.bf16 %v684, %v683
  %v704 = vpack.c.bf16 %v686, %v685
  %v705 = vpack.c.bf16 %v698, %v687
  %v706 = vpack.c.bf16 %v700, %v699
  %v707 = vpack.c.bf16 %v702, %v701
  %708 = vmatprep.subr.bf16.mxu0 0
  %709 = vmatpush1.bf16.msra.mxu0 %v703
  %710 = vmatprep.subr.bf16.mxu0 0
  %711 = vmatpush1.bf16.msra.mxu0 %v704
  %712 = vmatprep.subr.bf16.mxu0 0
  %713 = vmatpush1.bf16.msra.mxu0 %v705
  %714 = vmatprep.subr.bf16.mxu0 0
  %715 = vmatpush1.bf16.msra.mxu0 %v706
  %716 = vmatprep.subr.bf16.mxu0 0
  %717 = vmatpush1.bf16.msra.mxu0 %v707
  %718 = vmatprep.subr.bf16.mxu0 0
  %719 = vmatpush1.bf16.msra.mxu0 0
  %720 = vmatprep.subr.bf16.mxu0 0
  %721 = vmatpush1.bf16.msra.mxu0 0
  %722 = vmatprep.subr.bf16.mxu0 0
  %723 = vmatpush1.bf16.msra.mxu0 0
  %724 = vmatprep.subr.bf16.mxu0 0
  %725 = vmatpush1.bf16.msra.mxu0 0
  %726 = vmatprep.subr.bf16.mxu0 0
  %727 = vmatpush1.bf16.msra.mxu0 0
  %728 = vmatprep.subr.bf16.mxu0 0
  %729 = vmatpush1.bf16.msra.mxu0 0
  %730 = vmatprep.subr.bf16.mxu0 0
  %731 = vmatpush1.bf16.msra.mxu0 0
  %732 = vmatprep.subr.bf16.mxu0 0
  %733 = vmatpush1.bf16.msra.mxu0 0
  %734 = vmatprep.subr.bf16.mxu0 0
  %735 = vmatpush1.bf16.msra.mxu0 0
  %736 = vmatprep.subr.bf16.mxu0 0
  %737 = vmatpush1.bf16.msra.mxu0 0
  %738 = vmatprep.subr.bf16.mxu0 0
  %739 = vmatpush1.bf16.msra.mxu0 0
  %740 = vmatprep.mubr.bf16.mxu0 0
  %741 = vmatmul.mubr.bf16.gmra.mrb[0].mxu0 %v524
  %v742 = vpop.f32.mrb[0].mxu0
  %v743 = vadd.f32 0.0, %v742
  %v744 = vpop.f32.mrb[0].mxu0
  %v745 = vpop.f32.mrb[0].mxu0
  %v746 = vadd.f32 0.0, %v745
  %v747 = vpop.f32.mrb[0].mxu0
  %748 = vmatprep.mubr.bf16.mxu0 0
  %749 = vmatmul.mubr.bf16.gmra.mrb[0].mxu0 %v527
  %v750 = vpop.f32.mrb[0].mxu0
  %v751 = vadd.f32 0.0, %v750
  %v752 = vpop.f32.mrb[0].mxu0
  %v753 = vpop.f32.mrb[0].mxu0
  %v754 = vadd.f32 0.0, %v753
  %v755 = vpop.f32.mrb[0].mxu0
  %756 = vmatprep.mubr.bf16.mxu0 0
  %757 = vmatmul.mubr.bf16.gmra.mrb[0].mxu0 %v530
  %v758 = vpop.f32.mrb[0].mxu0
  %v759 = vadd.f32 0.0, %v758
  %v760 = vpop.f32.mrb[0].mxu0
  %v761 = vpop.f32.mrb[0].mxu0
  %v762 = vadd.f32 0.0, %v761
  %v763 = vpop.f32.mrb[0].mxu0
  %764 = vmatprep.mubr.bf16.mxu0 0
  %765 = vmatmul.mubr.bf16.gmra.mrb[0].mxu0 %v533
  %v766 = vpop.f32.mrb[0].mxu0
  %v767 = vadd.f32 0.0, %v766
  %v768 = vpop.f32.mrb[0].mxu0
  %v769 = vpop.f32.mrb[0].mxu0
  %v770 = vadd.f32 0.0, %v769
  %v771 = vpop.f32.mrb[0].mxu0
  %772 = vdwg.mxu0
  %v773 = vld [vmem:[%s3] sm:$0x1]
  %v774 = vld [vmem:[%s4] sm:$0x1]
  %v775 = vsel %vm63, %v570, 0.0
  %776 = vadd.xlane.f32.xlu0 %v775
  %v777 = vpop.xlane.xlu0 %776
  %v778 = vsel %vm63, %v573, 0.0
  %779 = vadd.xlane.f32.xlu0 %v778
  %v780 = vpop.xlane.xlu0 %779
  %v781 = vsel %vm63, %v578, 0.0
  %782 = vadd.xlane.f32.xlu0 %v781
  %v783 = vpop.xlane.xlu0 %782
  %v784 = vsel %vm63, %v581, 0.0
  %785 = vadd.xlane.f32.xlu0 %v784
  %v786 = vpop.xlane.xlu0 %785
  %v787 = vsel %vm63, %v586, 0.0
  %788 = vadd.xlane.f32.xlu0 %v787
  %v789 = vpop.xlane.xlu0 %788
  %v790 = vsel %vm63, %v589, 0.0
  %791 = vadd.xlane.f32.xlu0 %v790
  %v792 = vpop.xlane.xlu0 %791
  %v793 = vsel %vm63, %v594, 0.0
  %794 = vadd.xlane.f32.xlu0 %v793
  %v795 = vpop.xlane.xlu0 %794
  %v796 = vsel %vm63, %v597, 0.0
  %797 = vadd.xlane.f32.xlu0 %v796
  %v798 = vpop.xlane.xlu0 %797
  %v799 = vsel %vm63, %v743, 0.0
  %800 = vadd.xlane.f32.xlu0 %v799
  %v801 = vpop.xlane.xlu0 %800
  %v802 = vsel %vm63, %v746, 0.0
  %803 = vadd.xlane.f32.xlu0 %v802
  %v804 = vpop.xlane.xlu0 %803
  %v805 = vsel %vm63, %v751, 0.0
  %806 = vadd.xlane.f32.xlu0 %v805
  %v807 = vpop.xlane.xlu0 %806
  %v808 = vsel %vm63, %v754, 0.0
  %809 = vadd.xlane.f32.xlu0 %v808
  %v810 = vpop.xlane.xlu0 %809
  %v811 = vsel %vm63, %v759, 0.0
  %812 = vadd.xlane.f32.xlu0 %v811
  %v813 = vpop.xlane.xlu0 %812
  %v814 = vsel %vm63, %v762, 0.0
  %815 = vadd.xlane.f32.xlu0 %v814
  %v816 = vpop.xlane.xlu0 %815
  %v817 = vsel %vm63, %v767, 0.0
  %818 = vadd.xlane.f32.xlu0 %v817
  %v819 = vpop.xlane.xlu0 %818
  %v820 = vsel %vm63, %v770, 0.0
  %821 = vadd.xlane.f32.xlu0 %v820
  %v822 = vpop.xlane.xlu0 %821
  %v823 = vmul.f32 %v777, %v112
  %v824 = vmul.f32 %v780, %v112
  %v825 = vmul.f32 %v783, %v112
  %v826 = vmul.f32 %v786, %v112
  %v827 = vmul.f32 %v789, %v112
  %v828 = vmul.f32 %v792, %v112
  %v829 = vmul.f32 %v795, %v112
  %v830 = vmul.f32 %v798, %v112
  %v831 = vmul.f32 %v801, %v112
  %v832 = vmul.f32 %v804, %v112
  %v833 = vmul.f32 %v807, %v112
  %v834 = vmul.f32 %v810, %v112
  %v835 = vmul.f32 %v813, %v112
  %v836 = vmul.f32 %v816, %v112
  %v837 = vmul.f32 %v819, %v112
  %v838 = vmul.f32 %v822, %v112
  %v839 = vsub.f32 %v570, %v823
  %v840 = vsub.f32 %v573, %v824
  %v841 = vsub.f32 %v578, %v825
  %v842 = vsub.f32 %v581, %v826
  %v843 = vsub.f32 %v586, %v827
  %v844 = vsub.f32 %v589, %v828
  %v845 = vsub.f32 %v594, %v829
  %v846 = vsub.f32 %v597, %v830
  %v847 = vsub.f32 %v743, %v831
  %v848 = vsub.f32 %v746, %v832
  %v849 = vsub.f32 %v751, %v833
  %v850 = vsub.f32 %v754, %v834
  %v851 = vsub.f32 %v759, %v835
  %v852 = vsub.f32 %v762, %v836
  %v853 = vsub.f32 %v767, %v837
  %v854 = vsub.f32 %v770, %v838
  %v855 = vmul.f32 %v839, %v839
  %v856 = vmul.f32 %v840, %v840
  %v857 = vmul.f32 %v841, %v841
  %v858 = vmul.f32 %v842, %v842
  %v859 = vmul.f32 %v843, %v843
  %v860 = vmul.f32 %v844, %v844
  %v861 = vmul.f32 %v845, %v845
  %v862 = vmul.f32 %v846, %v846
  %v863 = vmul.f32 %v847, %v847
  %v864 = vmul.f32 %v848, %v848
  %v865 = vmul.f32 %v849, %v849
  %v866 = vmul.f32 %v850, %v850
  %v867 = vmul.f32 %v851, %v851
  %v868 = vmul.f32 %v852, %v852
  %v869 = vmul.f32 %v853, %v853
  %v870 = vmul.f32 %v854, %v854
  %v871 = vsel %vm63, %v855, 0.0
  %872 = vadd.xlane.f32.xlu0 %v871
  %v873 = vpop.xlane.xlu0 %872
  %v874 = vsel %vm63, %v856, 0.0
  %875 = vadd.xlane.f32.xlu0 %v874
  %v876 = vpop.xlane.xlu0 %875
  %v877 = vsel %vm63, %v857, 0.0
  %878 = vadd.xlane.f32.xlu0 %v877
  %v879 = vpop.xlane.xlu0 %878
  %v880 = vsel %vm63, %v858, 0.0
  %881 = vadd.xlane.f32.xlu0 %v880
  %v882 = vpop.xlane.xlu0 %881
  %v883 = vsel %vm63, %v859, 0.0
  %884 = vadd.xlane.f32.xlu0 %v883
  %v885 = vpop.xlane.xlu0 %884
  %v886 = vsel %vm63, %v860, 0.0
  %887 = vadd.xlane.f32.xlu0 %v886
  %v888 = vpop.xlane.xlu0 %887
  %v889 = vsel %vm63, %v861, 0.0
  %890 = vadd.xlane.f32.xlu0 %v889
  %v891 = vpop.xlane.xlu0 %890
  %v892 = vsel %vm63, %v862, 0.0
  %893 = vadd.xlane.f32.xlu0 %v892
  %v894 = vpop.xlane.xlu0 %893
  %v895 = vsel %vm63, %v863, 0.0
  %896 = vadd.xlane.f32.xlu0 %v895
  %v897 = vpop.xlane.xlu0 %896
  %v898 = vsel %vm63, %v864, 0.0
  %899 = vadd.xlane.f32.xlu0 %v898
  %v900 = vpop.xlane.xlu0 %899
  %v901 = vsel %vm63, %v865, 0.0
  %902 = vadd.xlane.f32.xlu0 %v901
  %v903 = vpop.xlane.xlu0 %902
  %v904 = vsel %vm63, %v866, 0.0
  %905 = vadd.xlane.f32.xlu0 %v904
  %v906 = vpop.xlane.xlu0 %905
  %v907 = vsel %vm63, %v867, 0.0
  %908 = vadd.xlane.f32.xlu0 %v907
  %v909 = vpop.xlane.xlu0 %908
  %v910 = vsel %vm63, %v868, 0.0
  %911 = vadd.xlane.f32.xlu0 %v910
  %v912 = vpop.xlane.xlu0 %911
  %v913 = vsel %vm63, %v869, 0.0
  %914 = vadd.xlane.f32.xlu0 %v913
  %v915 = vpop.xlane.xlu0 %914
  %v916 = vsel %vm63, %v870, 0.0
  %917 = vadd.xlane.f32.xlu0 %v916
  %v918 = vpop.xlane.xlu0 %917
  %v919 = vmul.f32 %v873, %v112
  %v920 = vmul.f32 %v876, %v112
  %v921 = vmul.f32 %v879, %v112
  %v922 = vmul.f32 %v882, %v112
  %v923 = vmul.f32 %v885, %v112
  %v924 = vmul.f32 %v888, %v112
  %v925 = vmul.f32 %v891, %v112
  %v926 = vmul.f32 %v894, %v112
  %v927 = vmul.f32 %v897, %v112
  %v928 = vmul.f32 %v900, %v112
  %v929 = vmul.f32 %v903, %v112
  %v930 = vmul.f32 %v906, %v112
  %v931 = vmul.f32 %v909, %v112
  %v932 = vmul.f32 %v912, %v112
  %v933 = vmul.f32 %v915, %v112
  %v934 = vmul.f32 %v918, %v112
  %v935 = vadd.f32 %v919, 1e-05
  %v936 = vadd.f32 %v920, 1e-05
  %v937 = vadd.f32 %v921, 1e-05
  %v938 = vadd.f32 %v922, 1e-05
  %v939 = vadd.f32 %v923, 1e-05
  %v940 = vadd.f32 %v924, 1e-05
  %v941 = vadd.f32 %v925, 1e-05
  %v942 = vadd.f32 %v926, 1e-05
  %v943 = vadd.f32 %v927, 1e-05
  %v944 = vadd.f32 %v928, 1e-05
  %v945 = vadd.f32 %v929, 1e-05
  %v946 = vadd.f32 %v930, 1e-05
  %v947 = vadd.f32 %v931, 1e-05
  %v948 = vadd.f32 %v932, 1e-05
  %v949 = vadd.f32 %v933, 1e-05
  %v950 = vadd.f32 %v934, 1e-05
  %v951 = vrsqrt.pop %v935
  %v952 = vrsqrt.pop %v936
  %v953 = vrsqrt.pop %v937
  %v954 = vrsqrt.pop %v938
  %v955 = vrsqrt.pop %v939
  %v956 = vrsqrt.pop %v940
  %v957 = vrsqrt.pop %v941
  %v958 = vrsqrt.pop %v942
  %v959 = vrsqrt.pop %v943
  %v960 = vrsqrt.pop %v944
  %v961 = vrsqrt.pop %v945
  %v962 = vrsqrt.pop %v946
  %v963 = vrsqrt.pop %v947
  %v964 = vrsqrt.pop %v948
  %v965 = vrsqrt.pop %v949
  %v966 = vrsqrt.pop %v950
  %v967 = vmul.f32 %v839, %v951
  %v968 = vmul.f32 %v840, %v952
  %v969 = vmul.f32 %v841, %v953
  %v970 = vmul.f32 %v842, %v954
  %v971 = vmul.f32 %v843, %v955
  %v972 = vmul.f32 %v844, %v956
  %v973 = vmul.f32 %v845, %v957
  %v974 = vmul.f32 %v846, %v958
  %v975 = vmul.f32 %v847, %v959
  %v976 = vmul.f32 %v848, %v960
  %v977 = vmul.f32 %v849, %v961
  %v978 = vmul.f32 %v850, %v962
  %v979 = vmul.f32 %v851, %v963
  %v980 = vmul.f32 %v852, %v964
  %v981 = vmul.f32 %v853, %v965
  %v982 = vmul.f32 %v854, %v966
  %v984 = vlaneseq
  %v985 = vshrl.u32 %v984, 7
  %v986 = vsub.s32 0, %v985
  %v987 = vrot.slane %v773, %v986
  %v989 = vmul.f32 %v967, %v987
  %v990 = vmul.f32 %v968, %v987
  %v991 = vmul.f32 %v969, %v987
  %v992 = vmul.f32 %v970, %v987
  %v993 = vmul.f32 %v971, %v987
  %v994 = vmul.f32 %v972, %v987
  %v995 = vmul.f32 %v973, %v987
  %v996 = vmul.f32 %v974, %v987
  %v997 = vmul.f32 %v975, %v987
  %v998 = vmul.f32 %v976, %v987
  %v999 = vmul.f32 %v977, %v987
  %v1000 = vmul.f32 %v978, %v987
  %v1001 = vmul.f32 %v979, %v987
  %v1002 = vmul.f32 %v980, %v987
  %v1003 = vmul.f32 %v981, %v987
  %v1004 = vmul.f32 %v982, %v987
  %v1006 = vlaneseq
  %v1007 = vshrl.u32 %v1006, 7
  %v1008 = vsub.s32 0, %v1007
  %v1009 = vrot.slane %v774, %v1008
  %v1011 = vadd.f32 %v989, %v1009
  %v1012 = vadd.f32 %v990, %v1009
  %v1013 = vadd.f32 %v991, %v1009
  %v1014 = vadd.f32 %v992, %v1009
  %v1015 = vadd.f32 %v993, %v1009
  %v1016 = vadd.f32 %v994, %v1009
  %v1017 = vadd.f32 %v995, %v1009
  %v1018 = vadd.f32 %v996, %v1009
  %v1019 = vadd.f32 %v997, %v1009
  %v1020 = vadd.f32 %v998, %v1009
  %v1021 = vadd.f32 %v999, %v1009
  %v1022 = vadd.f32 %v1000, %v1009
  %v1023 = vadd.f32 %v1001, %v1009
  %v1024 = vadd.f32 %v1002, %v1009
  %v1025 = vadd.f32 %v1003, %v1009
  %v1026 = vadd.f32 %v1004, %v1009
  %v1027 = vpack.c.bf16 %v1012, %v1011
  %v1028 = vpack.c.bf16 %v1014, %v1013
  %v1029 = vpack.c.bf16 %v1016, %v1015
  %v1030 = vpack.c.bf16 %v1018, %v1017
  %v1031 = vpack.c.bf16 %v1020, %v1019
  %v1032 = vpack.c.bf16 %v1022, %v1021
  %v1033 = vpack.c.bf16 %v1024, %v1023
  %v1034 = vpack.c.bf16 %v1026, %v1025
  %v1035 = vld [vmem:[%s9] sm:$0xf]
  %v1036 = vld [vmem:[%s9 + $0x4] sm:$0xf]
  %v1037 = vld [vmem:[%s9 + $0x8] sm:$0xf]
  %v1038 = vld [vmem:[%s9 + $0xc] sm:$0xf]
  %v1039 = vld [vmem:[%s10] sm:$0x1]
  %v1041 = vlaneseq
  %v1042 = vshrl.u32 %v1041, 7
  %v1043 = vsub.s32 0, %v1042
  %v1044 = vrot.slane %v1039, %v1043
  %v1050 = vunpack.c.l.b16 %v1035
  %v1051 = vunpack.c.l.b16 %v1036
  %v1052 = vunpack.c.l.b16 %v1037
  %v1053 = vunpack.c.l.b16 %v1038
  %v1054 = vpack.c.b16 %v1051, %v1050
  %v1055 = vpack.c.b16 %v1053, %v1052
  %v1059 = vsel %vm63, %v1027, 0
  %v1062 = vsel %vm63, %v1028, 0
  %v1065 = vsel %vm63, %v1029, 0
  %v1068 = vsel %vm63, %v1030, 0
  %v1071 = vsel %vm63, %v1031, 0
  %v1074 = vsel %vm63, %v1032, 0
  %v1077 = vsel %vm63, %v1033, 0
  %v1080 = vsel %vm63, %v1034, 0
  %1082 = vmatprep.subr.bf16.mxu0 0
  %1083 = vmatpush1.bf16.msra.mxu0 %v1054
  %1084 = vmatprep.subr.bf16.mxu0 0
  %1085 = vmatpush1.bf16.msra.mxu0 %v1055
  %1086 = vmatprep.subr.bf16.mxu0 0
  %1087 = vmatpush1.bf16.msra.mxu0 0
  %1088 = vmatprep.subr.bf16.mxu0 0
  %1089 = vmatpush1.bf16.msra.mxu0 0
  %1090 = vmatprep.subr.bf16.mxu0 0
  %1091 = vmatpush1.bf16.msra.mxu0 0
  %1092 = vmatprep.subr.bf16.mxu0 0
  %1093 = vmatpush1.bf16.msra.mxu0 0
  %1094 = vmatprep.subr.bf16.mxu0 0
  %1095 = vmatpush1.bf16.msra.mxu0 0
  %1096 = vmatprep.subr.bf16.mxu0 0
  %1097 = vmatpush1.bf16.msra.mxu0 0
  %1098 = vmatprep.subr.bf16.mxu0 0
  %1099 = vmatpush1.bf16.msra.mxu0 0
  %1100 = vmatprep.subr.bf16.mxu0 0
  %1101 = vmatpush1.bf16.msra.mxu0 0
  %1102 = vmatprep.subr.bf16.mxu0 0
  %1103 = vmatpush1.bf16.msra.mxu0 0
  %1104 = vmatprep.subr.bf16.mxu0 0
  %1105 = vmatpush1.bf16.msra.mxu0 0
  %1106 = vmatprep.subr.bf16.mxu0 0
  %1107 = vmatpush1.bf16.msra.mxu0 0
  %1108 = vmatprep.subr.bf16.mxu0 0
  %1109 = vmatpush1.bf16.msra.mxu0 0
  %1110 = vmatprep.subr.bf16.mxu0 0
  %1111 = vmatpush1.bf16.msra.mxu0 0
  %1112 = vmatprep.subr.bf16.mxu0 0
  %1113 = vmatpush1.bf16.msra.mxu0 0
  %1114 = vmatprep.mubr.bf16.mxu0 0
  %1115 = vmatmul.mubr.bf16.gmra.mrb[0].mxu0 %v1059
  %v1116 = vpop.f32.mrb[0].mxu0
  %v1117 = vadd.f32 %v1044, %v1116
  %v1118 = vpop.f32.mrb[0].mxu0
  %v1119 = vpop.f32.mrb[0].mxu0
  %v1120 = vadd.f32 %v1044, %v1119
  %v1121 = vpop.f32.mrb[0].mxu0
  %1122 = vmatprep.mubr.bf16.mxu0 0
  %1123 = vmatmul.mubr.bf16.gmra.mrb[0].mxu0 %v1062
  %v1124 = vpop.f32.mrb[0].mxu0
  %v1125 = vadd.f32 %v1044, %v1124
  %v1126 = vpop.f32.mrb[0].mxu0
  %v1127 = vpop.f32.mrb[0].mxu0
  %v1128 = vadd.f32 %v1044, %v1127
  %v1129 = vpop.f32.mrb[0].mxu0
  %1130 = vmatprep.mubr.bf16.mxu0 0
  %1131 = vmatmul.mubr.bf16.gmra.mrb[0].mxu0 %v1065
  %v1132 = vpop.f32.mrb[0].mxu0
  %v1133 = vadd.f32 %v1044, %v1132
  %v1134 = vpop.f32.mrb[0].mxu0
  %v1135 = vpop.f32.mrb[0].mxu0
  %v1136 = vadd.f32 %v1044, %v1135
  %v1137 = vpop.f32.mrb[0].mxu0
  %1138 = vmatprep.mubr.bf16.mxu0 0
  %1139 = vmatmul.mubr.bf16.gmra.mrb[0].mxu0 %v1068
  %v1140 = vpop.f32.mrb[0].mxu0
  %v1141 = vadd.f32 %v1044, %v1140
  %v1142 = vpop.f32.mrb[0].mxu0
  %v1143 = vpop.f32.mrb[0].mxu0
  %v1144 = vadd.f32 %v1044, %v1143
  %v1145 = vpop.f32.mrb[0].mxu0
  %1146 = vmatprep.mubr.bf16.mxu0 0
  %1147 = vmatmul.mubr.bf16.gmra.mrb[0].mxu0 %v1071
  %v1148 = vpop.f32.mrb[0].mxu0
  %v1149 = vadd.f32 %v1044, %v1148
  %v1150 = vpop.f32.mrb[0].mxu0
  %v1151 = vpop.f32.mrb[0].mxu0
  %v1152 = vadd.f32 %v1044, %v1151
  %v1153 = vpop.f32.mrb[0].mxu0
  %1154 = vmatprep.mubr.bf16.mxu0 0
  %1155 = vmatmul.mubr.bf16.gmra.mrb[0].mxu0 %v1074
  %v1156 = vpop.f32.mrb[0].mxu0
  %v1157 = vadd.f32 %v1044, %v1156
  %v1158 = vpop.f32.mrb[0].mxu0
  %v1159 = vpop.f32.mrb[0].mxu0
  %v1160 = vadd.f32 %v1044, %v1159
  %v1161 = vpop.f32.mrb[0].mxu0
  %1162 = vmatprep.mubr.bf16.mxu0 0
  %1163 = vmatmul.mubr.bf16.gmra.mrb[0].mxu0 %v1077
  %v1164 = vpop.f32.mrb[0].mxu0
  %v1165 = vadd.f32 %v1044, %v1164
  %v1166 = vpop.f32.mrb[0].mxu0
  %v1167 = vpop.f32.mrb[0].mxu0
  %v1168 = vadd.f32 %v1044, %v1167
  %v1169 = vpop.f32.mrb[0].mxu0
  %1170 = vmatprep.mubr.bf16.mxu0 0
  %1171 = vmatmul.mubr.bf16.gmra.mrb[0].mxu0 %v1080
  %v1172 = vpop.f32.mrb[0].mxu0
  %v1173 = vadd.f32 %v1044, %v1172
  %v1174 = vpop.f32.mrb[0].mxu0
  %v1175 = vpop.f32.mrb[0].mxu0
  %v1176 = vadd.f32 %v1044, %v1175
  %v1177 = vpop.f32.mrb[0].mxu0
  %1178 = vdwg.mxu0
  %v1179 = vmul.f32 %v1117, 0.5
  %v1180 = vmul.f32 %v1120, 0.5
  %v1181 = vmul.f32 %v1125, 0.5
  %v1182 = vmul.f32 %v1128, 0.5
  %v1183 = vmul.f32 %v1133, 0.5
  %v1184 = vmul.f32 %v1136, 0.5
  %v1185 = vmul.f32 %v1141, 0.5
  %v1186 = vmul.f32 %v1144, 0.5
  %v1187 = vmul.f32 %v1149, 0.5
  %v1188 = vmul.f32 %v1152, 0.5
  %v1189 = vmul.f32 %v1157, 0.5
  %v1190 = vmul.f32 %v1160, 0.5
  %v1191 = vmul.f32 %v1165, 0.5
  %v1192 = vmul.f32 %v1168, 0.5
  %v1193 = vmul.f32 %v1173, 0.5
  %v1194 = vmul.f32 %v1176, 0.5
  %v1195 = vmul.f32 %v1117, 0.70710677
  %v1196 = vmul.f32 %v1120, 0.70710677
  %v1197 = vmul.f32 %v1125, 0.70710677
  %v1198 = vmul.f32 %v1128, 0.70710677
  %v1199 = vmul.f32 %v1133, 0.70710677
  %v1200 = vmul.f32 %v1136, 0.70710677
  %v1201 = vmul.f32 %v1141, 0.70710677
  %v1202 = vmul.f32 %v1144, 0.70710677
  %v1203 = vmul.f32 %v1149, 0.70710677
  %v1204 = vmul.f32 %v1152, 0.70710677
  %v1205 = vmul.f32 %v1157, 0.70710677
  %v1206 = vmul.f32 %v1160, 0.70710677
  %v1207 = vmul.f32 %v1165, 0.70710677
  %v1208 = vmul.f32 %v1168, 0.70710677
  %v1209 = vmul.f32 %v1173, 0.70710677
  %v1210 = vmul.f32 %v1176, 0.70710677
  %v1211 = vand.u32 2147483647, %v1195
  %v1212 = vand.u32 2147483647, %v1196
  %v1213 = vand.u32 2147483647, %v1197
  %v1214 = vand.u32 2147483647, %v1198
  %v1215 = vand.u32 2147483647, %v1199
  %v1216 = vand.u32 2147483647, %v1200
  %v1217 = vand.u32 2147483647, %v1201
  %v1218 = vand.u32 2147483647, %v1202
  %v1219 = vand.u32 2147483647, %v1203
  %v1220 = vand.u32 2147483647, %v1204
  %v1221 = vand.u32 2147483647, %v1205
  %v1222 = vand.u32 2147483647, %v1206
  %v1223 = vand.u32 2147483647, %v1207
  %v1224 = vand.u32 2147483647, %v1208
  %v1225 = vand.u32 2147483647, %v1209
  %v1226 = vand.u32 2147483647, %v1210
  %v1227 = vmul.f32 %v1211, 0.3275911
  %v1228 = vmul.f32 %v1212, 0.3275911
  %v1229 = vmul.f32 %v1213, 0.3275911
  %v1230 = vmul.f32 %v1214, 0.3275911
  %v1231 = vmul.f32 %v1215, 0.3275911
  %v1232 = vmul.f32 %v1216, 0.3275911
  %v1233 = vmul.f32 %v1217, 0.3275911
  %v1234 = vmul.f32 %v1218, 0.3275911
  %v1235 = vmul.f32 %v1219, 0.3275911
  %v1236 = vmul.f32 %v1220, 0.3275911
  %v1237 = vmul.f32 %v1221, 0.3275911
  %v1238 = vmul.f32 %v1222, 0.3275911
  %v1239 = vmul.f32 %v1223, 0.3275911
  %v1240 = vmul.f32 %v1224, 0.3275911
  %v1241 = vmul.f32 %v1225, 0.3275911
  %v1242 = vmul.f32 %v1226, 0.3275911
  %v1243 = vadd.f32 %v1227, 1.0
  %v1244 = vadd.f32 %v1228, 1.0
  %v1245 = vadd.f32 %v1229, 1.0
  %v1246 = vadd.f32 %v1230, 1.0
  %v1247 = vadd.f32 %v1231, 1.0
  %v1248 = vadd.f32 %v1232, 1.0
  %v1249 = vadd.f32 %v1233, 1.0
  %v1250 = vadd.f32 %v1234, 1.0
  %v1251 = vadd.f32 %v1235, 1.0
  %v1252 = vadd.f32 %v1236, 1.0
  %v1253 = vadd.f32 %v1237, 1.0
  %v1254 = vadd.f32 %v1238, 1.0
  %v1255 = vadd.f32 %v1239, 1.0
  %v1256 = vadd.f32 %v1240, 1.0
  %v1257 = vadd.f32 %v1241, 1.0
  %v1258 = vadd.f32 %v1242, 1.0
  %v1259 = vrcp.pop %v1243
  %v1260 = vmul.f32 1.0, %v1259
  %v1261 = vrcp.pop %v1244
  %v1262 = vmul.f32 1.0, %v1261
  %v1263 = vrcp.pop %v1245
  %v1264 = vmul.f32 1.0, %v1263
  %v1265 = vrcp.pop %v1246
  %v1266 = vmul.f32 1.0, %v1265
  %v1267 = vrcp.pop %v1247
  %v1268 = vmul.f32 1.0, %v1267
  %v1269 = vrcp.pop %v1248
  %v1270 = vmul.f32 1.0, %v1269
  %v1271 = vrcp.pop %v1249
  %v1272 = vmul.f32 1.0, %v1271
  %v1273 = vrcp.pop %v1250
  %v1274 = vmul.f32 1.0, %v1273
  %v1275 = vrcp.pop %v1251
  %v1276 = vmul.f32 1.0, %v1275
  %v1277 = vrcp.pop %v1252
  %v1278 = vmul.f32 1.0, %v1277
  %v1279 = vrcp.pop %v1253
  %v1280 = vmul.f32 1.0, %v1279
  %v1281 = vrcp.pop %v1254
  %v1282 = vmul.f32 1.0, %v1281
  %v1283 = vrcp.pop %v1255
  %v1284 = vmul.f32 1.0, %v1283
  %v1285 = vrcp.pop %v1256
  %v1286 = vmul.f32 1.0, %v1285
  %v1287 = vrcp.pop %v1257
  %v1288 = vmul.f32 1.0, %v1287
  %v1289 = vrcp.pop %v1258
  %v1290 = vmul.f32 1.0, %v1289
  %v1291 = vmul.f32 %v1260, 1.0614054
  %v1292 = vmul.f32 %v1262, 1.0614054
  %v1293 = vmul.f32 %v1264, 1.0614054
  %v1294 = vmul.f32 %v1266, 1.0614054
  %v1295 = vmul.f32 %v1268, 1.0614054
  %v1296 = vmul.f32 %v1270, 1.0614054
  %v1297 = vmul.f32 %v1272, 1.0614054
  %v1298 = vmul.f32 %v1274, 1.0614054
  %v1299 = vmul.f32 %v1276, 1.0614054
  %v1300 = vmul.f32 %v1278, 1.0614054
  %v1301 = vmul.f32 %v1280, 1.0614054
  %v1302 = vmul.f32 %v1282, 1.0614054
  %v1303 = vmul.f32 %v1284, 1.0614054
  %v1304 = vmul.f32 %v1286, 1.0614054
  %v1305 = vmul.f32 %v1288, 1.0614054
  %v1306 = vmul.f32 %v1290, 1.0614054
  %v1307 = vadd.f32 %v1291, -1.4531521
  %v1308 = vadd.f32 %v1292, -1.4531521
  %v1309 = vadd.f32 %v1293, -1.4531521
  %v1310 = vadd.f32 %v1294, -1.4531521
  %v1311 = vadd.f32 %v1295, -1.4531521
  %v1312 = vadd.f32 %v1296, -1.4531521
  %v1313 = vadd.f32 %v1297, -1.4531521
  %v1314 = vadd.f32 %v1298, -1.4531521
  %v1315 = vadd.f32 %v1299, -1.4531521
  %v1316 = vadd.f32 %v1300, -1.4531521
  %v1317 = vadd.f32 %v1301, -1.4531521
  %v1318 = vadd.f32 %v1302, -1.4531521
  %v1319 = vadd.f32 %v1303, -1.4531521
  %v1320 = vadd.f32 %v1304, -1.4531521
  %v1321 = vadd.f32 %v1305, -1.4531521
  %v1322 = vadd.f32 %v1306, -1.4531521
  %v1323 = vmul.f32 %v1307, %v1260
  %v1324 = vmul.f32 %v1308, %v1262
  %v1325 = vmul.f32 %v1309, %v1264
  %v1326 = vmul.f32 %v1310, %v1266
  %v1327 = vmul.f32 %v1311, %v1268
  %v1328 = vmul.f32 %v1312, %v1270
  %v1329 = vmul.f32 %v1313, %v1272
  %v1330 = vmul.f32 %v1314, %v1274
  %v1331 = vmul.f32 %v1315, %v1276
  %v1332 = vmul.f32 %v1316, %v1278
  %v1333 = vmul.f32 %v1317, %v1280
  %v1334 = vmul.f32 %v1318, %v1282
  %v1335 = vmul.f32 %v1319, %v1284
  %v1336 = vmul.f32 %v1320, %v1286
  %v1337 = vmul.f32 %v1321, %v1288
  %v1338 = vmul.f32 %v1322, %v1290
  %v1339 = vadd.f32 %v1323, 1.4214138
  %v1340 = vadd.f32 %v1324, 1.4214138
  %v1341 = vadd.f32 %v1325, 1.4214138
  %v1342 = vadd.f32 %v1326, 1.4214138
  %v1343 = vadd.f32 %v1327, 1.4214138
  %v1344 = vadd.f32 %v1328, 1.4214138
  %v1345 = vadd.f32 %v1329, 1.4214138
  %v1346 = vadd.f32 %v1330, 1.4214138
  %v1347 = vadd.f32 %v1331, 1.4214138
  %v1348 = vadd.f32 %v1332, 1.4214138
  %v1349 = vadd.f32 %v1333, 1.4214138
  %v1350 = vadd.f32 %v1334, 1.4214138
  %v1351 = vadd.f32 %v1335, 1.4214138
  %v1352 = vadd.f32 %v1336, 1.4214138
  %v1353 = vadd.f32 %v1337, 1.4214138
  %v1354 = vadd.f32 %v1338, 1.4214138
  %v1355 = vmul.f32 %v1339, %v1260
  %v1356 = vmul.f32 %v1340, %v1262
  %v1357 = vmul.f32 %v1341, %v1264
  %v1358 = vmul.f32 %v1342, %v1266
  %v1359 = vmul.f32 %v1343, %v1268
  %v1360 = vmul.f32 %v1344, %v1270
  %v1361 = vmul.f32 %v1345, %v1272
  %v1362 = vmul.f32 %v1346, %v1274
  %v1363 = vmul.f32 %v1347, %v1276
  %v1364 = vmul.f32 %v1348, %v1278
  %v1365 = vmul.f32 %v1349, %v1280
  %v1366 = vmul.f32 %v1350, %v1282
  %v1367 = vmul.f32 %v1351, %v1284
  %v1368 = vmul.f32 %v1352, %v1286
  %v1369 = vmul.f32 %v1353, %v1288
  %v1370 = vmul.f32 %v1354, %v1290
  %v1371 = vadd.f32 %v1355, -0.28449672
  %v1372 = vadd.f32 %v1356, -0.28449672
  %v1373 = vadd.f32 %v1357, -0.28449672
  %v1374 = vadd.f32 %v1358, -0.28449672
  %v1375 = vadd.f32 %v1359, -0.28449672
  %v1376 = vadd.f32 %v1360, -0.28449672
  %v1377 = vadd.f32 %v1361, -0.28449672
  %v1378 = vadd.f32 %v1362, -0.28449672
  %v1379 = vadd.f32 %v1363, -0.28449672
  %v1380 = vadd.f32 %v1364, -0.28449672
  %v1381 = vadd.f32 %v1365, -0.28449672
  %v1382 = vadd.f32 %v1366, -0.28449672
  %v1383 = vadd.f32 %v1367, -0.28449672
  %v1384 = vadd.f32 %v1368, -0.28449672
  %v1385 = vadd.f32 %v1369, -0.28449672
  %v1386 = vadd.f32 %v1370, -0.28449672
  %v1387 = vmul.f32 %v1371, %v1260
  %v1388 = vmul.f32 %v1372, %v1262
  %v1389 = vmul.f32 %v1373, %v1264
  %v1390 = vmul.f32 %v1374, %v1266
  %v1391 = vmul.f32 %v1375, %v1268
  %v1392 = vmul.f32 %v1376, %v1270
  %v1393 = vmul.f32 %v1377, %v1272
  %v1394 = vmul.f32 %v1378, %v1274
  %v1395 = vmul.f32 %v1379, %v1276
  %v1396 = vmul.f32 %v1380, %v1278
  %v1397 = vmul.f32 %v1381, %v1280
  %v1398 = vmul.f32 %v1382, %v1282
  %v1399 = vmul.f32 %v1383, %v1284
  %v1400 = vmul.f32 %v1384, %v1286
  %v1401 = vmul.f32 %v1385, %v1288
  %v1402 = vmul.f32 %v1386, %v1290
  %v1403 = vadd.f32 %v1387, 0.2548296
  %v1404 = vadd.f32 %v1388, 0.2548296
  %v1405 = vadd.f32 %v1389, 0.2548296
  %v1406 = vadd.f32 %v1390, 0.2548296
  %v1407 = vadd.f32 %v1391, 0.2548296
  %v1408 = vadd.f32 %v1392, 0.2548296
  %v1409 = vadd.f32 %v1393, 0.2548296
  %v1410 = vadd.f32 %v1394, 0.2548296
  %v1411 = vadd.f32 %v1395, 0.2548296
  %v1412 = vadd.f32 %v1396, 0.2548296
  %v1413 = vadd.f32 %v1397, 0.2548296
  %v1414 = vadd.f32 %v1398, 0.2548296
  %v1415 = vadd.f32 %v1399, 0.2548296
  %v1416 = vadd.f32 %v1400, 0.2548296
  %v1417 = vadd.f32 %v1401, 0.2548296
  %v1418 = vadd.f32 %v1402, 0.2548296
  %v1419 = vmul.f32 %v1403, %v1260
  %v1420 = vmul.f32 %v1404, %v1262
  %v1421 = vmul.f32 %v1405, %v1264
  %v1422 = vmul.f32 %v1406, %v1266
  %v1423 = vmul.f32 %v1407, %v1268
  %v1424 = vmul.f32 %v1408, %v1270
  %v1425 = vmul.f32 %v1409, %v1272
  %v1426 = vmul.f32 %v1410, %v1274
  %v1427 = vmul.f32 %v1411, %v1276
  %v1428 = vmul.f32 %v1412, %v1278
  %v1429 = vmul.f32 %v1413, %v1280
  %v1430 = vmul.f32 %v1414, %v1282
  %v1431 = vmul.f32 %v1415, %v1284
  %v1432 = vmul.f32 %v1416, %v1286
  %v1433 = vmul.f32 %v1417, %v1288
  %v1434 = vmul.f32 %v1418, %v1290
  %v1435 = vsub.f32 0.0, %v1211
  %v1436 = vsub.f32 0.0, %v1212
  %v1437 = vsub.f32 0.0, %v1213
  %v1438 = vsub.f32 0.0, %v1214
  %v1439 = vsub.f32 0.0, %v1215
  %v1440 = vsub.f32 0.0, %v1216
  %v1441 = vsub.f32 0.0, %v1217
  %v1442 = vsub.f32 0.0, %v1218
  %v1443 = vsub.f32 0.0, %v1219
  %v1444 = vsub.f32 0.0, %v1220
  %v1445 = vsub.f32 0.0, %v1221
  %v1446 = vsub.f32 0.0, %v1222
  %v1447 = vsub.f32 0.0, %v1223
  %v1448 = vsub.f32 0.0, %v1224
  %v1449 = vsub.f32 0.0, %v1225
  %v1450 = vsub.f32 0.0, %v1226
  %v1451 = vmul.f32 %v1435, %v1211
  %v1452 = vmul.f32 %v1436, %v1212
  %v1453 = vmul.f32 %v1437, %v1213
  %v1454 = vmul.f32 %v1438, %v1214
  %v1455 = vmul.f32 %v1439, %v1215
  %v1456 = vmul.f32 %v1440, %v1216
  %v1457 = vmul.f32 %v1441, %v1217
  %v1458 = vmul.f32 %v1442, %v1218
  %v1459 = vmul.f32 %v1443, %v1219
  %v1460 = vmul.f32 %v1444, %v1220
  %v1461 = vmul.f32 %v1445, %v1221
  %v1462 = vmul.f32 %v1446, %v1222
  %v1463 = vmul.f32 %v1447, %v1223
  %v1464 = vmul.f32 %v1448, %v1224
  %v1465 = vmul.f32 %v1449, %v1225
  %v1466 = vmul.f32 %v1450, %v1226
  %v1467 = vmul.f32 %v1451, 1.442695
  %v1468 = vpow.pop %v1467
  %v1469 = vmul.f32 %v1452, 1.442695
  %v1470 = vpow.pop %v1469
  %v1471 = vmul.f32 %v1453, 1.442695
  %v1472 = vpow.pop %v1471
  %v1473 = vmul.f32 %v1454, 1.442695
  %v1474 = vpow.pop %v1473
  %v1475 = vmul.f32 %v1455, 1.442695
  %v1476 = vpow.pop %v1475
  %v1477 = vmul.f32 %v1456, 1.442695
  %v1478 = vpow.pop %v1477
  %v1479 = vmul.f32 %v1457, 1.442695
  %v1480 = vpow.pop %v1479
  %v1481 = vmul.f32 %v1458, 1.442695
  %v1482 = vpow.pop %v1481
  %v1483 = vmul.f32 %v1459, 1.442695
  %v1484 = vpow.pop %v1483
  %v1485 = vmul.f32 %v1460, 1.442695
  %v1486 = vpow.pop %v1485
  %v1487 = vmul.f32 %v1461, 1.442695
  %v1488 = vpow.pop %v1487
  %v1489 = vmul.f32 %v1462, 1.442695
  %v1490 = vpow.pop %v1489
  %v1491 = vmul.f32 %v1463, 1.442695
  %v1492 = vpow.pop %v1491
  %v1493 = vmul.f32 %v1464, 1.442695
  %v1494 = vpow.pop %v1493
  %v1495 = vmul.f32 %v1465, 1.442695
  %v1496 = vpow.pop %v1495
  %v1497 = vmul.f32 %v1466, 1.442695
  %v1498 = vpow.pop %v1497
  %v1499 = vmul.f32 %v1419, %v1468
  %v1500 = vmul.f32 %v1420, %v1470
  %v1501 = vmul.f32 %v1421, %v1472
  %v1502 = vmul.f32 %v1422, %v1474
  %v1503 = vmul.f32 %v1423, %v1476
  %v1504 = vmul.f32 %v1424, %v1478
  %v1505 = vmul.f32 %v1425, %v1480
  %v1506 = vmul.f32 %v1426, %v1482
  %v1507 = vmul.f32 %v1427, %v1484
  %v1508 = vmul.f32 %v1428, %v1486
  %v1509 = vmul.f32 %v1429, %v1488
  %v1510 = vmul.f32 %v1430, %v1490
  %v1511 = vmul.f32 %v1431, %v1492
  %v1512 = vmul.f32 %v1432, %v1494
  %v1513 = vmul.f32 %v1433, %v1496
  %v1514 = vmul.f32 %v1434, %v1498
  %v1515 = vsub.f32 1.0, %v1499
  %v1516 = vsub.f32 1.0, %v1500
  %v1517 = vsub.f32 1.0, %v1501
  %v1518 = vsub.f32 1.0, %v1502
  %v1519 = vsub.f32 1.0, %v1503
  %v1520 = vsub.f32 1.0, %v1504
  %v1521 = vsub.f32 1.0, %v1505
  %v1522 = vsub.f32 1.0, %v1506
  %v1523 = vsub.f32 1.0, %v1507
  %v1524 = vsub.f32 1.0, %v1508
  %v1525 = vsub.f32 1.0, %v1509
  %v1526 = vsub.f32 1.0, %v1510
  %v1527 = vsub.f32 1.0, %v1511
  %v1528 = vsub.f32 1.0, %v1512
  %v1529 = vsub.f32 1.0, %v1513
  %v1530 = vsub.f32 1.0, %v1514
  %vm1531 = vcmp.lt.f32.partialorder %v1195, 0.0
  %vm1532 = vcmp.lt.f32.partialorder %v1196, 0.0
  %vm1533 = vcmp.lt.f32.partialorder %v1197, 0.0
  %vm1534 = vcmp.lt.f32.partialorder %v1198, 0.0
  %vm1535 = vcmp.lt.f32.partialorder %v1199, 0.0
  %vm1536 = vcmp.lt.f32.partialorder %v1200, 0.0
  %vm1537 = vcmp.lt.f32.partialorder %v1201, 0.0
  %vm1538 = vcmp.lt.f32.partialorder %v1202, 0.0
  %vm1539 = vcmp.lt.f32.partialorder %v1203, 0.0
  %vm1540 = vcmp.lt.f32.partialorder %v1204, 0.0
  %vm1541 = vcmp.lt.f32.partialorder %v1205, 0.0
  %vm1542 = vcmp.lt.f32.partialorder %v1206, 0.0
  %vm1543 = vcmp.lt.f32.partialorder %v1207, 0.0
  %vm1544 = vcmp.lt.f32.partialorder %v1208, 0.0
  %vm1545 = vcmp.lt.f32.partialorder %v1209, 0.0
  %vm1546 = vcmp.lt.f32.partialorder %v1210, 0.0
  %v1547 = vsub.f32 0.0, %v1515
  %v1548 = vsub.f32 0.0, %v1516
  %v1549 = vsub.f32 0.0, %v1517
  %v1550 = vsub.f32 0.0, %v1518
  %v1551 = vsub.f32 0.0, %v1519
  %v1552 = vsub.f32 0.0, %v1520
  %v1553 = vsub.f32 0.0, %v1521
  %v1554 = vsub.f32 0.0, %v1522
  %v1555 = vsub.f32 0.0, %v1523
  %v1556 = vsub.f32 0.0, %v1524
  %v1557 = vsub.f32 0.0, %v1525
  %v1558 = vsub.f32 0.0, %v1526
  %v1559 = vsub.f32 0.0, %v1527
  %v1560 = vsub.f32 0.0, %v1528
  %v1561 = vsub.f32 0.0, %v1529
  %v1562 = vsub.f32 0.0, %v1530
  %v1563 = vsel %vm1531, %v1547, %v1515
  %v1564 = vsel %vm1532, %v1548, %v1516
  %v1565 = vsel %vm1533, %v1549, %v1517
  %v1566 = vsel %vm1534, %v1550, %v1518
  %v1567 = vsel %vm1535, %v1551, %v1519
  %v1568 = vsel %vm1536, %v1552, %v1520
  %v1569 = vsel %vm1537, %v1553, %v1521
  %v1570 = vsel %vm1538, %v1554, %v1522
  %v1571 = vsel %vm1539, %v1555, %v1523
  %v1572 = vsel %vm1540, %v1556, %v1524
  %v1573 = vsel %vm1541, %v1557, %v1525
  %v1574 = vsel %vm1542, %v1558, %v1526
  %v1575 = vsel %vm1543, %v1559, %v1527
  %v1576 = vsel %vm1544, %v1560, %v1528
  %v1577 = vsel %vm1545, %v1561, %v1529
  %v1578 = vsel %vm1546, %v1562, %v1530
  %v1579 = vadd.f32 %v1563, 1.0
  %v1580 = vadd.f32 %v1564, 1.0
  %v1581 = vadd.f32 %v1565, 1.0
  %v1582 = vadd.f32 %v1566, 1.0
  %v1583 = vadd.f32 %v1567, 1.0
  %v1584 = vadd.f32 %v1568, 1.0
  %v1585 = vadd.f32 %v1569, 1.0
  %v1586 = vadd.f32 %v1570, 1.0
  %v1587 = vadd.f32 %v1571, 1.0
  %v1588 = vadd.f32 %v1572, 1.0
  %v1589 = vadd.f32 %v1573, 1.0
  %v1590 = vadd.f32 %v1574, 1.0
  %v1591 = vadd.f32 %v1575, 1.0
  %v1592 = vadd.f32 %v1576, 1.0
  %v1593 = vadd.f32 %v1577, 1.0
  %v1594 = vadd.f32 %v1578, 1.0
  %v1595 = vmul.f32 %v1179, %v1579
  %v1596 = vmul.f32 %v1180, %v1580
  %v1597 = vmul.f32 %v1181, %v1581
  %v1598 = vmul.f32 %v1182, %v1582
  %v1599 = vmul.f32 %v1183, %v1583
  %v1600 = vmul.f32 %v1184, %v1584
  %v1601 = vmul.f32 %v1185, %v1585
  %v1602 = vmul.f32 %v1186, %v1586
  %v1603 = vmul.f32 %v1187, %v1587
  %v1604 = vmul.f32 %v1188, %v1588
  %v1605 = vmul.f32 %v1189, %v1589
  %v1606 = vmul.f32 %v1190, %v1590
  %v1607 = vmul.f32 %v1191, %v1591
  %v1608 = vmul.f32 %v1192, %v1592
  %v1609 = vmul.f32 %v1193, %v1593
  %v1610 = vmul.f32 %v1194, %v1594
  %v1611 = vpack.c.bf16 %v1596, %v1595
  %v1612 = vpack.c.bf16 %v1598, %v1597
  %v1613 = vpack.c.bf16 %v1600, %v1599
  %v1614 = vpack.c.bf16 %v1602, %v1601
  %v1615 = vpack.c.bf16 %v1604, %v1603
  %v1616 = vpack.c.bf16 %v1606, %v1605
  %v1617 = vpack.c.bf16 %v1608, %v1607
  %v1618 = vpack.c.bf16 %v1610, %v1609
  %v1619 = vld [vmem:[%s11] sm:$0xf]
  %v1620 = vld [vmem:[%s11 + $0x4] sm:$0xf]
  %v1621 = vld [vmem:[%s11 + $0x8] sm:$0xf]
  %v1622 = vld [vmem:[%s11 + $0xc] sm:$0xf]
  %v1623 = vld [vmem:[%s11 + $0x10] sm:$0xf]
  %v1624 = vld [vmem:[%s11 + $0x14] sm:$0xf]
  %v1625 = vld [vmem:[%s11 + $0x18] sm:$0xf]
  %v1626 = vld [vmem:[%s11 + $0x1c] sm:$0xf]
  %v1627 = vld [vmem:[%s11 + $0x20] sm:$0xf]
  %v1628 = vld [vmem:[%s11 + $0x24] sm:$0xf]
  %v1629 = vld [vmem:[%s11 + $0x28] sm:$0xf]
  %v1630 = vld [vmem:[%s11 + $0x2c] sm:$0xf]
  %v1631 = vld [vmem:[%s11 + $0x30] sm:$0xf]
  %v1632 = vld [vmem:[%s11 + $0x34] sm:$0xf]
  %v1633 = vld [vmem:[%s11 + $0x38] sm:$0xf]
  %v1634 = vld [vmem:[%s11 + $0x3c] sm:$0xf]
  %v1635 = vld [vmem:[%s12] sm:$0x1]
  %v1637 = vlaneseq
  %v1638 = vshrl.u32 %v1637, 7
  %v1639 = vsub.s32 0, %v1638
  %v1640 = vrot.slane %v1635, %v1639
  %v1658 = vunpack.c.l.b16 %v1619
  %v1659 = vunpack.c.l.b16 %v1620
  %v1660 = vunpack.c.l.b16 %v1621
  %v1661 = vunpack.c.l.b16 %v1622
  %v1662 = vunpack.c.l.b16 %v1623
  %v1663 = vunpack.c.l.b16 %v1624
  %v1664 = vunpack.c.l.b16 %v1625
  %v1665 = vunpack.c.l.b16 %v1626
  %v1666 = vunpack.c.l.b16 %v1627
  %v1667 = vunpack.c.l.b16 %v1628
  %v1668 = vunpack.c.l.b16 %v1629
  %v1669 = vunpack.c.l.b16 %v1630
  %v1670 = vunpack.c.l.b16 %v1631
  %v1671 = vunpack.c.l.b16 %v1632
  %v1672 = vunpack.c.l.b16 %v1633
  %v1673 = vunpack.c.l.b16 %v1634
  %v1674 = vpack.c.b16 %v1659, %v1658
  %v1675 = vpack.c.b16 %v1661, %v1660
  %v1676 = vpack.c.b16 %v1663, %v1662
  %v1677 = vpack.c.b16 %v1665, %v1664
  %v1678 = vpack.c.b16 %v1667, %v1666
  %v1679 = vpack.c.b16 %v1669, %v1668
  %v1680 = vpack.c.b16 %v1671, %v1670
  %v1681 = vpack.c.b16 %v1673, %v1672
  %1690 = vmatprep.subr.bf16.mxu0 0
  %1691 = vmatpush1.bf16.msra.mxu0 %v1674
  %1692 = vmatprep.subr.bf16.mxu0 0
  %1693 = vmatpush1.bf16.msra.mxu0 %v1675
  %1694 = vmatprep.subr.bf16.mxu0 0
  %1695 = vmatpush1.bf16.msra.mxu0 %v1676
  %1696 = vmatprep.subr.bf16.mxu0 0
  %1697 = vmatpush1.bf16.msra.mxu0 %v1677
  %1698 = vmatprep.subr.bf16.mxu0 0
  %1699 = vmatpush1.bf16.msra.mxu0 %v1678
  %1700 = vmatprep.subr.bf16.mxu0 0
  %1701 = vmatpush1.bf16.msra.mxu0 %v1679
  %1702 = vmatprep.subr.bf16.mxu0 0
  %1703 = vmatpush1.bf16.msra.mxu0 %v1680
  %1704 = vmatprep.subr.bf16.mxu0 0
  %1705 = vmatpush1.bf16.msra.mxu0 %v1681
  %1706 = vmatprep.subr.bf16.mxu0 0
  %1707 = vmatpush1.bf16.msra.mxu0 0
  %1708 = vmatprep.subr.bf16.mxu0 0
  %1709 = vmatpush1.bf16.msra.mxu0 0
  %1710 = vmatprep.subr.bf16.mxu0 0
  %1711 = vmatpush1.bf16.msra.mxu0 0
  %1712 = vmatprep.subr.bf16.mxu0 0
  %1713 = vmatpush1.bf16.msra.mxu0 0
  %1714 = vmatprep.subr.bf16.mxu0 0
  %1715 = vmatpush1.bf16.msra.mxu0 0
  %1716 = vmatprep.subr.bf16.mxu0 0
  %1717 = vmatpush1.bf16.msra.mxu0 0
  %1718 = vmatprep.subr.bf16.mxu0 0
  %1719 = vmatpush1.bf16.msra.mxu0 0
  %1720 = vmatprep.subr.bf16.mxu0 0
  %1721 = vmatpush1.bf16.msra.mxu0 0
  %1722 = vmatprep.mubr.bf16.mxu0 0
  %1723 = vmatmul.mubr.bf16.gmra.mrb[0].mxu0 %v1611
  %v1724 = vpop.f32.mrb[0].mxu0
  %v1725 = vadd.f32 %v1640, %v1724
  %v1726 = vpop.f32.mrb[0].mxu0
  %v1727 = vpop.f32.mrb[0].mxu0
  %v1728 = vadd.f32 %v1640, %v1727
  %v1729 = vpop.f32.mrb[0].mxu0
  %1730 = vmatprep.mubr.bf16.mxu0 0
  %1731 = vmatmul.mubr.bf16.gmra.mrb[0].mxu0 %v1612
  %v1732 = vpop.f32.mrb[0].mxu0
  %v1733 = vadd.f32 %v1640, %v1732
  %v1734 = vpop.f32.mrb[0].mxu0
  %v1735 = vpop.f32.mrb[0].mxu0
  %v1736 = vadd.f32 %v1640, %v1735
  %v1737 = vpop.f32.mrb[0].mxu0
  %1738 = vmatprep.mubr.bf16.mxu0 0
  %1739 = vmatmul.mubr.bf16.gmra.mrb[0].mxu0 %v1613
  %v1740 = vpop.f32.mrb[0].mxu0
  %v1741 = vadd.f32 %v1640, %v1740
  %v1742 = vpop.f32.mrb[0].mxu0
  %v1743 = vpop.f32.mrb[0].mxu0
  %v1744 = vadd.f32 %v1640, %v1743
  %v1745 = vpop.f32.mrb[0].mxu0
  %1746 = vmatprep.mubr.bf16.mxu0 0
  %1747 = vmatmul.mubr.bf16.gmra.mrb[0].mxu0 %v1614
  %v1748 = vpop.f32.mrb[0].mxu0
  %v1749 = vadd.f32 %v1640, %v1748
  %v1750 = vpop.f32.mrb[0].mxu0
  %v1751 = vpop.f32.mrb[0].mxu0
  %v1752 = vadd.f32 %v1640, %v1751
  %v1753 = vpop.f32.mrb[0].mxu0
  %1754 = vmatprep.mubr.bf16.mxu0 0
  %1755 = vmatmul.mubr.bf16.gmra.mrb[0].mxu0 %v1615
  %v1756 = vpop.f32.mrb[0].mxu0
  %v1757 = vadd.f32 %v1640, %v1756
  %v1758 = vpop.f32.mrb[0].mxu0
  %v1759 = vpop.f32.mrb[0].mxu0
  %v1760 = vadd.f32 %v1640, %v1759
  %v1761 = vpop.f32.mrb[0].mxu0
  %1762 = vmatprep.mubr.bf16.mxu0 0
  %1763 = vmatmul.mubr.bf16.gmra.mrb[0].mxu0 %v1616
  %v1764 = vpop.f32.mrb[0].mxu0
  %v1765 = vadd.f32 %v1640, %v1764
  %v1766 = vpop.f32.mrb[0].mxu0
  %v1767 = vpop.f32.mrb[0].mxu0
  %v1768 = vadd.f32 %v1640, %v1767
  %v1769 = vpop.f32.mrb[0].mxu0
  %1770 = vmatprep.mubr.bf16.mxu0 0
  %1771 = vmatmul.mubr.bf16.gmra.mrb[0].mxu0 %v1617
  %v1772 = vpop.f32.mrb[0].mxu0
  %v1773 = vadd.f32 %v1640, %v1772
  %v1774 = vpop.f32.mrb[0].mxu0
  %v1775 = vpop.f32.mrb[0].mxu0
  %v1776 = vadd.f32 %v1640, %v1775
  %v1777 = vpop.f32.mrb[0].mxu0
  %1778 = vmatprep.mubr.bf16.mxu0 0
  %1779 = vmatmul.mubr.bf16.gmra.mrb[0].mxu0 %v1618
  %v1780 = vpop.f32.mrb[0].mxu0
  %v1781 = vadd.f32 %v1640, %v1780
  %v1782 = vpop.f32.mrb[0].mxu0
  %v1783 = vpop.f32.mrb[0].mxu0
  %v1784 = vadd.f32 %v1640, %v1783
  %v1785 = vpop.f32.mrb[0].mxu0
  %1786 = vdwg.mxu0
  %v1787 = vadd.f32 %v45, %v1725
  %v1788 = vadd.f32 %v46, %v1728
  %v1789 = vadd.f32 %v47, %v1733
  %v1790 = vadd.f32 %v48, %v1736
  %v1791 = vadd.f32 %v49, %v1741
  %v1792 = vadd.f32 %v50, %v1744
  %v1793 = vadd.f32 %v51, %v1749
  %v1794 = vadd.f32 %v52, %v1752
  %v1795 = vadd.f32 %v53, %v1757
  %v1796 = vadd.f32 %v54, %v1760
  %v1797 = vadd.f32 %v55, %v1765
  %v1798 = vadd.f32 %v56, %v1768
  %v1799 = vadd.f32 %v57, %v1773
  %v1800 = vadd.f32 %v58, %v1776
  %v1801 = vadd.f32 %v59, %v1781
  %v1802 = vadd.f32 %v60, %v1784
  %1803 = vst.msk [vmem:[%s13] sm:$0xff] %vm63, %v1787
  %1804 = vst.msk [vmem:[%s13 + $0x8] sm:$0xff] %vm63, %v1788
  %1805 = vst.msk [vmem:[%s13 + $0x10] sm:$0xff] %vm63, %v1789
  %1806 = vst.msk [vmem:[%s13 + $0x18] sm:$0xff] %vm63, %v1790
  %1807 = vst.msk [vmem:[%s13 + $0x20] sm:$0xff] %vm63, %v1791
  %1808 = vst.msk [vmem:[%s13 + $0x28] sm:$0xff] %vm63, %v1792
  %1809 = vst.msk [vmem:[%s13 + $0x30] sm:$0xff] %vm63, %v1793
  %1810 = vst.msk [vmem:[%s13 + $0x38] sm:$0xff] %vm63, %v1794
  %1811 = vst.msk [vmem:[%s13 + $0x40] sm:$0xff] %vm63, %v1795
  %1812 = vst.msk [vmem:[%s13 + $0x48] sm:$0xff] %vm63, %v1796
  %1813 = vst.msk [vmem:[%s13 + $0x50] sm:$0xff] %vm63, %v1797
  %1814 = vst.msk [vmem:[%s13 + $0x58] sm:$0xff] %vm63, %v1798
  %1815 = vst.msk [vmem:[%s13 + $0x60] sm:$0xff] %vm63, %v1799
  %1816 = vst.msk [vmem:[%s13 + $0x68] sm:$0xff] %vm63, %v1800
  %1817 = vst.msk [vmem:[%s13 + $0x70] sm:$0xff] %vm63, %v1801
  %1818 = vst.msk [vmem:[%s13 + $0x78] sm:$0xff] %vm63, %v1802
  // Predicated region
  $region54: #{tpu_custom_call.1} parent=0 // pred_check
    _
  $region55: #{tpu_custom_call.1} parent=0 // pred_check_branch
    %1820 = sbr.rel (0) target = $region57
  $region56: #{tpu_custom_call.1} parent=0 // pred_region
    _
  $region57: #{tpu_custom_call.1} parent=0 // pred_fallthru
    _
  // Predicated region
  $region58: #{tpu_custom_call.1} parent=0 // pred_check
    _
  $region59: #{tpu_custom_call.1} parent=0 // pred_check_branch
    %1822 = sbr.rel (0) target = $region61
  $region60: #{tpu_custom_call.1} parent=0 // pred_region
    _
  $region61: #{tpu_custom_call.1} parent=0 // pred_fallthru
    _

</llo_original>
